<compile_context>
chip_gen: v6e
topology: v6e:2x2x1
jax: 0.10.0
libtpu: 0.0.40
codegen_flags: <defaults>
</compile_context>

<pallas_src>
import functools

import jax
import jax.numpy as jnp
from jax.experimental import pallas as pl
from jax.experimental.pallas import tpu as pltpu


# ----------------------------- Pallas kernel --------------------------------
def motion_dec_kernel(x_ref,
                      cw1, cb1, cw2, cb2, cw3, cb3, cw4, cb4, cw5, cb5,
                      pw0, pb0, pw1, pb1,
                      out_ref, *, seq_len):
    h = x_ref[...]                                         # (R, C) f32
    rows = h.shape[0]

    # Hoisted per-sample boundary keep-masks (float 0/1, shape (rows, 1)).
    # Valid because ROW_TILE % seq_len == 0 => block starts at a seq boundary.
    row = jax.lax.broadcasted_iota(jnp.int32, (rows, 1), 0)
    prev_keep = (row % seq_len != 0).astype(jnp.float32)
    next_keep = (row % seq_len != seq_len - 1).astype(jnp.float32)

    def conv1d(h, w_ref, b_ref):
        # Conv1d(k=3, padding=1) in (rows, C) layout as three accumulated
        # bf16 matmuls (taps stacked on axis 0 of the weight: prev/center/next).
        # Non-negative shifts only: roll by rows-1 == cyclic shift of -1.
        h_prev = (pltpu.roll(h, shift=1, axis=0) * prev_keep).astype(jnp.bfloat16)
        h_next = (pltpu.roll(h, shift=rows - 1, axis=0) * next_keep).astype(jnp.bfloat16)
        h_cur = h.astype(jnp.bfloat16)
        y = jnp.dot(h_prev, w_ref[0], preferred_element_type=jnp.float32)
        y = y + jnp.dot(h_cur, w_ref[1], preferred_element_type=jnp.float32)
        y = y + jnp.dot(h_next, w_ref[2], preferred_element_type=jnp.float32)
        return y + b_ref[...]

    # TODO(synk): ConvNet's exact definition is not part of the provided spec;
    # assumed Conv1d(k=3, pad=1) + ReLU per level (dropout = identity at eval).
    for w_ref, b_ref in ((cw1, cb1), (cw2, cb2), (cw3, cb3),
                         (cw4, cb4), (cw5, cb5)):
        h = jax.nn.relu(conv1d(h, w_ref, b_ref))

    # pose_g : Linear(256, 256) -> ReLU -> Linear(256, output_dim)
    h = jax.nn.relu(jnp.dot(h.astype(jnp.bfloat16), pw0[...],
                            preferred_element_type=jnp.float32) + pb0[...])
    out_ref[...] = jnp.dot(h.astype(jnp.bfloat16), pw1[...],
                           preferred_element_type=jnp.float32) + pb1[...]


# ------------------------------- wrapper -------------------------------------
def motion_dec_forward(share, spec, params, *, row_tile_target=512):
    B, T, _ = share.shape
    rows = B * T
    c_in = share.shape[-1] + spec.shape[-1]
    out_dim = params["pw1"].shape[-1]

    # torch.cat((share_feature, spec_feature), dim=2) done once in the wrapper
    # so it fuses into the input DMA (single (rows, C) input stream).
    x = jnp.concatenate([share, spec], axis=-1).reshape(rows, c_in)
    x = x.astype(jnp.float32)

    # ROW_TILE: a multiple of T (whole sequences per block) that divides rows,
    # near row_tile_target so the MXU M dimension stays well fed.  Sized to be
    # safe for v7x's 64 MiB VMEM (weights ~0.9 MiB bf16 + f32 activation tiles).
    n_seq = rows // T
    seqs_per_block = max(1, min(n_seq, max(1, row_tile_target // T)))
    while n_seq % seqs_per_block:
        seqs_per_block -= 1
    row_tile = seqs_per_block * T
    grid = (rows // row_tile,)

    weight_args = [
        params["cw1"], params["cb1"], params["cw2"], params["cb2"],
        params["cw3"], params["cb3"], params["cw4"], params["cb4"],
        params["cw5"], params["cb5"],
        params["pw0"], params["pb0"], params["pw1"], params["pb1"],
    ]

    def resident(a):
        # Constant index_map -> weight DMA'd once, VMEM-resident across blocks.
        nd = a.ndim
        return pl.BlockSpec(a.shape, lambda i, _nd=nd: (0,) * _nd)

    out = pl.pallas_call(
        functools.partial(motion_dec_kernel, seq_len=T),
        out_shape=jax.ShapeDtypeStruct((rows, out_dim), jnp.float32),
        grid_spec=pltpu.PrefetchScalarGridSpec(
            num_scalar_prefetch=0,
            grid=grid,
            in_specs=[pl.BlockSpec((row_tile, c_in), lambda i: (i, 0))]
                     + [resident(a) for a in weight_args],
            out_specs=pl.BlockSpec((row_tile, out_dim), lambda i: (i, 0)),
        ),
        compiler_params=pltpu.CompilerParams(
            dimension_semantics=("parallel",)),   # v7x: shard blocks over 2 TCs
    )(x, *weight_args)
    return out.reshape(B, T, out_dim)


# --------------------------- param construction ------------------------------
def init_params(key, hidden_size, channels, output_dim):
    params = {}
    keys = iter(jax.random.split(key, 2 * (len(channels) + 2)))

    def w(shape, fan_in, dtype):
        scale = 1.0 / (fan_in ** 0.5)
        return (scale * jax.random.normal(next(keys), shape)).astype(dtype)

    c_in = hidden_size
    for i, c_out in enumerate(channels, start=1):
        # Conv1d weight: taps stacked [prev, center, next] along axis 0, bf16.
        params[f"cw{i}"] = w((3, c_in, c_out), 3 * c_in, jnp.bfloat16)
        params[f"cb{i}"] = w((1, c_out), 3 * c_in, jnp.float32)
        c_in = c_out
    params["pw0"] = w((c_in, 256), c_in, jnp.bfloat16)
    params["pb0"] = w((1, 256), c_in, jnp.float32)
    params["pw1"] = w((256, output_dim), 256, jnp.bfloat16)
    params["pb1"] = w((1, output_dim), 256, jnp.float32)
    return params


# ------------------------- pure-JAX reference --------------------------------
def ref_forward(share, spec, p, num_conv):
    x = jnp.concatenate([share, spec], axis=-1)          # (B, T, C)
    dot = lambda a, wt: jnp.einsum("btc,cd->btd", a, wt.astype(jnp.float32),
                                   precision=jax.lax.Precision.HIGHEST)

    def conv(h, w3, b):
        hp = jnp.pad(h, ((0, 0), (1, 1), (0, 0)))
        return (dot(hp[:, :-2], w3[0]) + dot(hp[:, 1:-1], w3[1])
                + dot(hp[:, 2:], w3[2]) + b)

    h = x
    for i in range(1, num_conv + 1):
        h = jax.nn.relu(conv(h, p[f"cw{i}"], p[f"cb{i}"]))
    h = jax.nn.relu(dot(h, p["pw0"]) + p["pb0"])
    return dot(h, p["pw1"]) + p["pb1"]


if __name__ == "__main__":
    # args.hidden_size = 32 (share 16 + spec 16 channels),
    # ConvNet channels [64, 128, 128, 256, 256],
    # output_joint_repr_dim = 16, output_joint_num = 8 -> output_dim = 128.
    B, T = 2, 8
    C_SHARE, C_SPEC = 16, 16
    HIDDEN = C_SHARE + C_SPEC
    CHANNELS = (64, 128, 128, 256, 256)
    OUT_DIM = 16 * 8

    key = jax.random.PRNGKey(0)
    k_share, k_spec, k_p = jax.random.split(key, 3)
    share = jax.random.normal(k_share, (B, T, C_SHARE), dtype=jnp.float32)
    spec = jax.random.normal(k_spec, (B, T, C_SPEC), dtype=jnp.float32)
    params = init_params(k_p, HIDDEN, CHANNELS, OUT_DIM)

    out = motion_dec_forward(share, spec, params)
    out = jax.block_until_ready(out)

    ref = ref_forward(share, spec, params, len(CHANNELS))
    assert out.shape == (B, T, OUT_DIM)
    err = float(jnp.max(jnp.abs(out - ref)))
    rel = err / max(1e-6, float(jnp.max(jnp.abs(ref))))
    assert err < 5e-2 or rel < 2e-2, (
        f"mismatch vs reference (max |diff| = {err}, rel = {rel})")

    print("KERNEL_OK")
</pallas_src>

<mosaic_0001>
module attributes {stable_mosaic.version = 11 : i64} {
  func.func @motion_dec_kernel(%arg0: i32, %arg1: memref<16x32xf32, #tpu.memory_space<vmem>>, %arg2: memref<3x32x64xbf16, #tpu.memory_space<vmem>>, %arg3: memref<1x64xf32, #tpu.memory_space<vmem>>, %arg4: memref<3x64x128xbf16, #tpu.memory_space<vmem>>, %arg5: memref<1x128xf32, #tpu.memory_space<vmem>>, %arg6: memref<3x128x128xbf16, #tpu.memory_space<vmem>>, %arg7: memref<1x128xf32, #tpu.memory_space<vmem>>, %arg8: memref<3x128x256xbf16, #tpu.memory_space<vmem>>, %arg9: memref<1x256xf32, #tpu.memory_space<vmem>>, %arg10: memref<3x256x256xbf16, #tpu.memory_space<vmem>>, %arg11: memref<1x256xf32, #tpu.memory_space<vmem>>, %arg12: memref<256x256xbf16, #tpu.memory_space<vmem>>, %arg13: memref<1x256xf32, #tpu.memory_space<vmem>>, %arg14: memref<256x128xbf16, #tpu.memory_space<vmem>>, %arg15: memref<1x128xf32, #tpu.memory_space<vmem>>, %arg16: memref<16x128xf32, #tpu.memory_space<vmem>>) attributes {dimension_semantics = [#tpu.dimension_semantics<parallel>], iteration_bounds = array<i64: 1>, scalar_prefetch = 0 : i64, scratch_operands = 0 : i64, tpu.core_type = #tpu.core_type<tc>, window_params = [{transform_indices = @transform_0, window_bounds = array<i64: 16, 32>}, {pipeline_mode = #tpu.pipeline_mode<synchronous>, transform_indices = @transform_1, window_bounds = array<i64: 3, 32, 64>}, {pipeline_mode = #tpu.pipeline_mode<synchronous>, transform_indices = @transform_2, window_bounds = array<i64: 1, 64>}, {pipeline_mode = #tpu.pipeline_mode<synchronous>, transform_indices = @transform_3, window_bounds = array<i64: 3, 64, 128>}, {pipeline_mode = #tpu.pipeline_mode<synchronous>, transform_indices = @transform_4, window_bounds = array<i64: 1, 128>}, {pipeline_mode = #tpu.pipeline_mode<synchronous>, transform_indices = @transform_5, window_bounds = array<i64: 3, 128, 128>}, {pipeline_mode = #tpu.pipeline_mode<synchronous>, transform_indices = @transform_6, window_bounds = array<i64: 1, 128>}, {pipeline_mode = #tpu.pipeline_mode<synchronous>, transform_indices = @transform_7, window_bounds = array<i64: 3, 128, 256>}, {pipeline_mode = #tpu.pipeline_mode<synchronous>, transform_indices = @transform_8, window_bounds = array<i64: 1, 256>}, {pipeline_mode = #tpu.pipeline_mode<synchronous>, transform_indices = @transform_9, window_bounds = array<i64: 3, 256, 256>}, {pipeline_mode = #tpu.pipeline_mode<synchronous>, transform_indices = @transform_10, window_bounds = array<i64: 1, 256>}, {pipeline_mode = #tpu.pipeline_mode<synchronous>, transform_indices = @transform_11, window_bounds = array<i64: 256, 256>}, {pipeline_mode = #tpu.pipeline_mode<synchronous>, transform_indices = @transform_12, window_bounds = array<i64: 1, 256>}, {pipeline_mode = #tpu.pipeline_mode<synchronous>, transform_indices = @transform_13, window_bounds = array<i64: 256, 128>}, {pipeline_mode = #tpu.pipeline_mode<synchronous>, transform_indices = @transform_14, window_bounds = array<i64: 1, 128>}, {transform_indices = @transform_15, window_bounds = array<i64: 16, 128>}]} {
    %c0 = arith.constant 0 : index
    %c0_0 = arith.constant 0 : index
    %0 = vector.load %arg1[%c0, %c0_0] : memref<16x32xf32, #tpu.memory_space<vmem>>, vector<16x32xf32>
    %1 = tpu.iota {dimensions = array<i32: 0>} : vector<16x1xi32>
    %c8_i32 = arith.constant 8 : i32
    %c0_i32 = arith.constant 0 : i32
    %2 = arith.cmpi eq, %c8_i32, %c0_i32 : i32
    %c1_i32 = arith.constant 1 : i32
    %3 = arith.select %2, %c1_i32, %c8_i32 : i32
    %4 = vector.broadcast %3 : i32 to vector<16x1xi32>
    %5 = arith.remsi %1, %4 : vector<16x1xi32>
    %c0_i32_1 = arith.constant 0 : i32
    %6 = vector.broadcast %c0_i32_1 : i32 to vector<16x1xi32>
    %7 = arith.cmpi ne, %5, %6 : vector<16x1xi32>
    %c0_i32_2 = arith.constant 0 : i32
    %8 = vector.broadcast %c0_i32_2 : i32 to vector<16x1xi32>
    %9 = arith.cmpi slt, %5, %8 : vector<16x1xi32>
    %c0_i32_3 = arith.constant 0 : i32
    %10 = arith.cmpi slt, %3, %c0_i32_3 : i32
    %11 = vector.broadcast %10 : i1 to vector<16x1xi1>
    %12 = vector.broadcast %11 : vector<16x1xi1> to vector<16x1xi1>
    %13 = arith.xori %9, %12 : vector<16x1xi1>
    %14 = arith.andi %13, %7 : vector<16x1xi1>
    %15 = vector.broadcast %3 : i32 to vector<16x1xi32>
    %16 = arith.addi %5, %15 : vector<16x1xi32>
    %17 = arith.select %14, %16, %5 : vector<16x1xi1>, vector<16x1xi32>
    %c0_i32_4 = arith.constant 0 : i32
    %18 = vector.broadcast %c0_i32_4 : i32 to vector<16x1xi32>
    %19 = arith.cmpi ne, %17, %18 : vector<16x1xi32>
    %20 = arith.extui %19 : vector<16x1xi1> to vector<16x1xi32>
    %21 = arith.sitofp %20 : vector<16x1xi32> to vector<16x1xf32>
    %c8_i32_5 = arith.constant 8 : i32
    %c0_i32_6 = arith.constant 0 : i32
    %22 = arith.cmpi eq, %c8_i32_5, %c0_i32_6 : i32
    %c1_i32_7 = arith.constant 1 : i32
    %23 = arith.select %22, %c1_i32_7, %c8_i32_5 : i32
    %24 = vector.broadcast %23 : i32 to vector<16x1xi32>
    %25 = arith.remsi %1, %24 : vector<16x1xi32>
    %c0_i32_8 = arith.constant 0 : i32
    %26 = vector.broadcast %c0_i32_8 : i32 to vector<16x1xi32>
    %27 = arith.cmpi ne, %25, %26 : vector<16x1xi32>
    %c0_i32_9 = arith.constant 0 : i32
    %28 = vector.broadcast %c0_i32_9 : i32 to vector<16x1xi32>
    %29 = arith.cmpi slt, %25, %28 : vector<16x1xi32>
    %c0_i32_10 = arith.constant 0 : i32
    %30 = arith.cmpi slt, %23, %c0_i32_10 : i32
    %31 = vector.broadcast %30 : i1 to vector<16x1xi1>
    %32 = vector.broadcast %31 : vector<16x1xi1> to vector<16x1xi1>
    %33 = arith.xori %29, %32 : vector<16x1xi1>
    %34 = arith.andi %33, %27 : vector<16x1xi1>
    %35 = vector.broadcast %23 : i32 to vector<16x1xi32>
    %36 = arith.addi %25, %35 : vector<16x1xi32>
    %37 = arith.select %34, %36, %25 : vector<16x1xi1>, vector<16x1xi32>
    %c7_i32 = arith.constant 7 : i32
    %38 = vector.broadcast %c7_i32 : i32 to vector<16x1xi32>
    %39 = arith.cmpi ne, %37, %38 : vector<16x1xi32>
    %40 = arith.extui %39 : vector<16x1xi1> to vector<16x1xi32>
    %41 = arith.sitofp %40 : vector<16x1xi32> to vector<16x1xf32>
    %c1_i32_11 = arith.constant 1 : i32
    %42 = tpu.dynamic_rotate %0 by %c1_i32_11 dim 0 : vector<16x32xf32>, i32 -> vector<16x32xf32>
    %43 = vector.broadcast %21 : vector<16x1xf32> to vector<16x32xf32>
    %44 = arith.mulf %42, %43 : vector<16x32xf32>
    %45 = arith.truncf %44 : vector<16x32xf32> to vector<16x32xbf16>
    %c15_i32 = arith.constant 15 : i32
    %46 = tpu.dynamic_rotate %0 by %c15_i32 dim 0 : vector<16x32xf32>, i32 -> vector<16x32xf32>
    %47 = vector.broadcast %41 : vector<16x1xf32> to vector<16x32xf32>
    %48 = arith.mulf %46, %47 : vector<16x32xf32>
    %49 = arith.truncf %48 : vector<16x32xf32> to vector<16x32xbf16>
    %50 = arith.truncf %0 : vector<16x32xf32> to vector<16x32xbf16>
    %c0_12 = arith.constant 0 : index
    %c0_13 = arith.constant 0 : index
    %c0_14 = arith.constant 0 : index
    %51 = vector.load %arg2[%c0_12, %c0_13, %c0_14] : memref<3x32x64xbf16, #tpu.memory_space<vmem>>, vector<1x32x64xbf16>
    %52 = vector.shape_cast %51 : vector<1x32x64xbf16> to vector<32x64xbf16>
    %cst = arith.constant dense<0.000000e+00> : vector<16x64xf32>
    %53 = tpu.matmul %45, %52, %cst {dimension_numbers = #tpu.dot_dimension_numbers<[1], [0], [0], [1], [0, 0, 1, 1], [], []>} : vector<16x32xbf16>, vector<32x64xbf16>, vector<16x64xf32> -> vector<16x64xf32>
    %c1 = arith.constant 1 : index
    %c0_15 = arith.constant 0 : index
    %c0_16 = arith.constant 0 : index
    %54 = vector.load %arg2[%c1, %c0_15, %c0_16] : memref<3x32x64xbf16, #tpu.memory_space<vmem>>, vector<1x32x64xbf16>
    %55 = vector.shape_cast %54 : vector<1x32x64xbf16> to vector<32x64xbf16>
    %cst_17 = arith.constant dense<0.000000e+00> : vector<16x64xf32>
    %56 = tpu.matmul %50, %55, %cst_17 {dimension_numbers = #tpu.dot_dimension_numbers<[1], [0], [0], [1], [0, 0, 1, 1], [], []>} : vector<16x32xbf16>, vector<32x64xbf16>, vector<16x64xf32> -> vector<16x64xf32>
    %57 = arith.addf %53, %56 : vector<16x64xf32>
    %c2 = arith.constant 2 : index
    %c0_18 = arith.constant 0 : index
    %c0_19 = arith.constant 0 : index
    %58 = vector.load %arg2[%c2, %c0_18, %c0_19] : memref<3x32x64xbf16, #tpu.memory_space<vmem>>, vector<1x32x64xbf16>
    %59 = vector.shape_cast %58 : vector<1x32x64xbf16> to vector<32x64xbf16>
    %cst_20 = arith.constant dense<0.000000e+00> : vector<16x64xf32>
    %60 = tpu.matmul %49, %59, %cst_20 {dimension_numbers = #tpu.dot_dimension_numbers<[1], [0], [0], [1], [0, 0, 1, 1], [], []>} : vector<16x32xbf16>, vector<32x64xbf16>, vector<16x64xf32> -> vector<16x64xf32>
    %61 = arith.addf %57, %60 : vector<16x64xf32>
    %c0_21 = arith.constant 0 : index
    %c0_22 = arith.constant 0 : index
    %62 = vector.load %arg3[%c0_21, %c0_22] : memref<1x64xf32, #tpu.memory_space<vmem>>, vector<1x64xf32>
    %63 = vector.broadcast %62 : vector<1x64xf32> to vector<16x64xf32>
    %64 = arith.addf %61, %63 : vector<16x64xf32>
    %cst_23 = arith.constant 0.000000e+00 : f32
    %65 = vector.broadcast %cst_23 : f32 to vector<16x64xf32>
    %66 = arith.maximumf %64, %65 : vector<16x64xf32>
    %c1_i32_24 = arith.constant 1 : i32
    %67 = tpu.dynamic_rotate %66 by %c1_i32_24 dim 0 : vector<16x64xf32>, i32 -> vector<16x64xf32>
    %68 = vector.broadcast %21 : vector<16x1xf32> to vector<16x64xf32>
    %69 = arith.mulf %67, %68 : vector<16x64xf32>
    %70 = arith.truncf %69 : vector<16x64xf32> to vector<16x64xbf16>
    %c15_i32_25 = arith.constant 15 : i32
    %71 = tpu.dynamic_rotate %66 by %c15_i32_25 dim 0 : vector<16x64xf32>, i32 -> vector<16x64xf32>
    %72 = vector.broadcast %41 : vector<16x1xf32> to vector<16x64xf32>
    %73 = arith.mulf %71, %72 : vector<16x64xf32>
    %74 = arith.truncf %73 : vector<16x64xf32> to vector<16x64xbf16>
    %75 = arith.truncf %66 : vector<16x64xf32> to vector<16x64xbf16>
    %c0_26 = arith.constant 0 : index
    %c0_27 = arith.constant 0 : index
    %c0_28 = arith.constant 0 : index
    %76 = vector.load %arg4[%c0_26, %c0_27, %c0_28] : memref<3x64x128xbf16, #tpu.memory_space<vmem>>, vector<1x64x128xbf16>
    %77 = vector.shape_cast %76 : vector<1x64x128xbf16> to vector<64x128xbf16>
    %cst_29 = arith.constant dense<0.000000e+00> : vector<16x128xf32>
    %78 = tpu.matmul %70, %77, %cst_29 {dimension_numbers = #tpu.dot_dimension_numbers<[1], [0], [0], [1], [0, 0, 1, 1], [], []>} : vector<16x64xbf16>, vector<64x128xbf16>, vector<16x128xf32> -> vector<16x128xf32>
    %c1_30 = arith.constant 1 : index
    %c0_31 = arith.constant 0 : index
    %c0_32 = arith.constant 0 : index
    %79 = vector.load %arg4[%c1_30, %c0_31, %c0_32] : memref<3x64x128xbf16, #tpu.memory_space<vmem>>, vector<1x64x128xbf16>
    %80 = vector.shape_cast %79 : vector<1x64x128xbf16> to vector<64x128xbf16>
    %cst_33 = arith.constant dense<0.000000e+00> : vector<16x128xf32>
    %81 = tpu.matmul %75, %80, %cst_33 {dimension_numbers = #tpu.dot_dimension_numbers<[1], [0], [0], [1], [0, 0, 1, 1], [], []>} : vector<16x64xbf16>, vector<64x128xbf16>, vector<16x128xf32> -> vector<16x128xf32>
    %82 = arith.addf %78, %81 : vector<16x128xf32>
    %c2_34 = arith.constant 2 : index
    %c0_35 = arith.constant 0 : index
    %c0_36 = arith.constant 0 : index
    %83 = vector.load %arg4[%c2_34, %c0_35, %c0_36] : memref<3x64x128xbf16, #tpu.memory_space<vmem>>, vector<1x64x128xbf16>
    %84 = vector.shape_cast %83 : vector<1x64x128xbf16> to vector<64x128xbf16>
    %cst_37 = arith.constant dense<0.000000e+00> : vector<16x128xf32>
    %85 = tpu.matmul %74, %84, %cst_37 {dimension_numbers = #tpu.dot_dimension_numbers<[1], [0], [0], [1], [0, 0, 1, 1], [], []>} : vector<16x64xbf16>, vector<64x128xbf16>, vector<16x128xf32> -> vector<16x128xf32>
    %86 = arith.addf %82, %85 : vector<16x128xf32>
    %c0_38 = arith.constant 0 : index
    %c0_39 = arith.constant 0 : index
    %87 = vector.load %arg5[%c0_38, %c0_39] : memref<1x128xf32, #tpu.memory_space<vmem>>, vector<1x128xf32>
    %88 = vector.broadcast %87 : vector<1x128xf32> to vector<16x128xf32>
    %89 = arith.addf %86, %88 : vector<16x128xf32>
    %cst_40 = arith.constant 0.000000e+00 : f32
    %90 = vector.broadcast %cst_40 : f32 to vector<16x128xf32>
    %91 = arith.maximumf %89, %90 : vector<16x128xf32>
    %c1_i32_41 = arith.constant 1 : i32
    %92 = tpu.dynamic_rotate %91 by %c1_i32_41 dim 0 : vector<16x128xf32>, i32 -> vector<16x128xf32>
    %93 = vector.broadcast %21 : vector<16x1xf32> to vector<16x128xf32>
    %94 = arith.mulf %92, %93 : vector<16x128xf32>
    %95 = arith.truncf %94 : vector<16x128xf32> to vector<16x128xbf16>
    %c15_i32_42 = arith.constant 15 : i32
    %96 = tpu.dynamic_rotate %91 by %c15_i32_42 dim 0 : vector<16x128xf32>, i32 -> vector<16x128xf32>
    %97 = vector.broadcast %41 : vector<16x1xf32> to vector<16x128xf32>
    %98 = arith.mulf %96, %97 : vector<16x128xf32>
    %99 = arith.truncf %98 : vector<16x128xf32> to vector<16x128xbf16>
    %100 = arith.truncf %91 : vector<16x128xf32> to vector<16x128xbf16>
    %c0_43 = arith.constant 0 : index
    %c0_44 = arith.constant 0 : index
    %c0_45 = arith.constant 0 : index
    %101 = vector.load %arg6[%c0_43, %c0_44, %c0_45] : memref<3x128x128xbf16, #tpu.memory_space<vmem>>, vector<1x128x128xbf16>
    %102 = vector.shape_cast %101 : vector<1x128x128xbf16> to vector<128x128xbf16>
    %cst_46 = arith.constant dense<0.000000e+00> : vector<16x128xf32>
    %103 = tpu.matmul %95, %102, %cst_46 {dimension_numbers = #tpu.dot_dimension_numbers<[1], [0], [0], [1], [0, 0, 1, 1], [], []>} : vector<16x128xbf16>, vector<128x128xbf16>, vector<16x128xf32> -> vector<16x128xf32>
    %c1_47 = arith.constant 1 : index
    %c0_48 = arith.constant 0 : index
    %c0_49 = arith.constant 0 : index
    %104 = vector.load %arg6[%c1_47, %c0_48, %c0_49] : memref<3x128x128xbf16, #tpu.memory_space<vmem>>, vector<1x128x128xbf16>
    %105 = vector.shape_cast %104 : vector<1x128x128xbf16> to vector<128x128xbf16>
    %cst_50 = arith.constant dense<0.000000e+00> : vector<16x128xf32>
    %106 = tpu.matmul %100, %105, %cst_50 {dimension_numbers = #tpu.dot_dimension_numbers<[1], [0], [0], [1], [0, 0, 1, 1], [], []>} : vector<16x128xbf16>, vector<128x128xbf16>, vector<16x128xf32> -> vector<16x128xf32>
    %107 = arith.addf %103, %106 : vector<16x128xf32>
    %c2_51 = arith.constant 2 : index
    %c0_52 = arith.constant 0 : index
    %c0_53 = arith.constant 0 : index
    %108 = vector.load %arg6[%c2_51, %c0_52, %c0_53] : memref<3x128x128xbf16, #tpu.memory_space<vmem>>, vector<1x128x128xbf16>
    %109 = vector.shape_cast %108 : vector<1x128x128xbf16> to vector<128x128xbf16>
    %cst_54 = arith.constant dense<0.000000e+00> : vector<16x128xf32>
    %110 = tpu.matmul %99, %109, %cst_54 {dimension_numbers = #tpu.dot_dimension_numbers<[1], [0], [0], [1], [0, 0, 1, 1], [], []>} : vector<16x128xbf16>, vector<128x128xbf16>, vector<16x128xf32> -> vector<16x128xf32>
    %111 = arith.addf %107, %110 : vector<16x128xf32>
    %c0_55 = arith.constant 0 : index
    %c0_56 = arith.constant 0 : index
    %112 = vector.load %arg7[%c0_55, %c0_56] : memref<1x128xf32, #tpu.memory_space<vmem>>, vector<1x128xf32>
    %113 = vector.broadcast %112 : vector<1x128xf32> to vector<16x128xf32>
    %114 = arith.addf %111, %113 : vector<16x128xf32>
    %cst_57 = arith.constant 0.000000e+00 : f32
    %115 = vector.broadcast %cst_57 : f32 to vector<16x128xf32>
    %116 = arith.maximumf %114, %115 : vector<16x128xf32>
    %c1_i32_58 = arith.constant 1 : i32
    %117 = tpu.dynamic_rotate %116 by %c1_i32_58 dim 0 : vector<16x128xf32>, i32 -> vector<16x128xf32>
    %118 = vector.broadcast %21 : vector<16x1xf32> to vector<16x128xf32>
    %119 = arith.mulf %117, %118 : vector<16x128xf32>
    %120 = arith.truncf %119 : vector<16x128xf32> to vector<16x128xbf16>
    %c15_i32_59 = arith.constant 15 : i32
    %121 = tpu.dynamic_rotate %116 by %c15_i32_59 dim 0 : vector<16x128xf32>, i32 -> vector<16x128xf32>
    %122 = vector.broadcast %41 : vector<16x1xf32> to vector<16x128xf32>
    %123 = arith.mulf %121, %122 : vector<16x128xf32>
    %124 = arith.truncf %123 : vector<16x128xf32> to vector<16x128xbf16>
    %125 = arith.truncf %116 : vector<16x128xf32> to vector<16x128xbf16>
    %c0_60 = arith.constant 0 : index
    %c0_61 = arith.constant 0 : index
    %c0_62 = arith.constant 0 : index
    %126 = vector.load %arg8[%c0_60, %c0_61, %c0_62] : memref<3x128x256xbf16, #tpu.memory_space<vmem>>, vector<1x128x256xbf16>
    %127 = vector.shape_cast %126 : vector<1x128x256xbf16> to vector<128x256xbf16>
    %cst_63 = arith.constant dense<0.000000e+00> : vector<16x256xf32>
    %128 = tpu.matmul %120, %127, %cst_63 {dimension_numbers = #tpu.dot_dimension_numbers<[1], [0], [0], [1], [0, 0, 1, 1], [], []>} : vector<16x128xbf16>, vector<128x256xbf16>, vector<16x256xf32> -> vector<16x256xf32>
    %c1_64 = arith.constant 1 : index
    %c0_65 = arith.constant 0 : index
    %c0_66 = arith.constant 0 : index
    %129 = vector.load %arg8[%c1_64, %c0_65, %c0_66] : memref<3x128x256xbf16, #tpu.memory_space<vmem>>, vector<1x128x256xbf16>
    %130 = vector.shape_cast %129 : vector<1x128x256xbf16> to vector<128x256xbf16>
    %cst_67 = arith.constant dense<0.000000e+00> : vector<16x256xf32>
    %131 = tpu.matmul %125, %130, %cst_67 {dimension_numbers = #tpu.dot_dimension_numbers<[1], [0], [0], [1], [0, 0, 1, 1], [], []>} : vector<16x128xbf16>, vector<128x256xbf16>, vector<16x256xf32> -> vector<16x256xf32>
    %132 = arith.addf %128, %131 : vector<16x256xf32>
    %c2_68 = arith.constant 2 : index
    %c0_69 = arith.constant 0 : index
    %c0_70 = arith.constant 0 : index
    %133 = vector.load %arg8[%c2_68, %c0_69, %c0_70] : memref<3x128x256xbf16, #tpu.memory_space<vmem>>, vector<1x128x256xbf16>
    %134 = vector.shape_cast %133 : vector<1x128x256xbf16> to vector<128x256xbf16>
    %cst_71 = arith.constant dense<0.000000e+00> : vector<16x256xf32>
    %135 = tpu.matmul %124, %134, %cst_71 {dimension_numbers = #tpu.dot_dimension_numbers<[1], [0], [0], [1], [0, 0, 1, 1], [], []>} : vector<16x128xbf16>, vector<128x256xbf16>, vector<16x256xf32> -> vector<16x256xf32>
    %136 = arith.addf %132, %135 : vector<16x256xf32>
    %c0_72 = arith.constant 0 : index
    %c0_73 = arith.constant 0 : index
    %137 = vector.load %arg9[%c0_72, %c0_73] : memref<1x256xf32, #tpu.memory_space<vmem>>, vector<1x256xf32>
    %138 = vector.broadcast %137 : vector<1x256xf32> to vector<16x256xf32>
    %139 = arith.addf %136, %138 : vector<16x256xf32>
    %cst_74 = arith.constant 0.000000e+00 : f32
    %140 = vector.broadcast %cst_74 : f32 to vector<16x256xf32>
    %141 = arith.maximumf %139, %140 : vector<16x256xf32>
    %c1_i32_75 = arith.constant 1 : i32
    %142 = tpu.dynamic_rotate %141 by %c1_i32_75 dim 0 : vector<16x256xf32>, i32 -> vector<16x256xf32>
    %143 = vector.broadcast %21 : vector<16x1xf32> to vector<16x256xf32>
    %144 = arith.mulf %142, %143 : vector<16x256xf32>
    %145 = arith.truncf %144 : vector<16x256xf32> to vector<16x256xbf16>
    %c15_i32_76 = arith.constant 15 : i32
    %146 = tpu.dynamic_rotate %141 by %c15_i32_76 dim 0 : vector<16x256xf32>, i32 -> vector<16x256xf32>
    %147 = vector.broadcast %41 : vector<16x1xf32> to vector<16x256xf32>
    %148 = arith.mulf %146, %147 : vector<16x256xf32>
    %149 = arith.truncf %148 : vector<16x256xf32> to vector<16x256xbf16>
    %150 = arith.truncf %141 : vector<16x256xf32> to vector<16x256xbf16>
    %c0_77 = arith.constant 0 : index
    %c0_78 = arith.constant 0 : index
    %c0_79 = arith.constant 0 : index
    %151 = vector.load %arg10[%c0_77, %c0_78, %c0_79] : memref<3x256x256xbf16, #tpu.memory_space<vmem>>, vector<1x256x256xbf16>
    %152 = vector.shape_cast %151 : vector<1x256x256xbf16> to vector<256x256xbf16>
    %cst_80 = arith.constant dense<0.000000e+00> : vector<16x256xf32>
    %153 = tpu.matmul %145, %152, %cst_80 {dimension_numbers = #tpu.dot_dimension_numbers<[1], [0], [0], [1], [0, 0, 1, 1], [], []>} : vector<16x256xbf16>, vector<256x256xbf16>, vector<16x256xf32> -> vector<16x256xf32>
    %c1_81 = arith.constant 1 : index
    %c0_82 = arith.constant 0 : index
    %c0_83 = arith.constant 0 : index
    %154 = vector.load %arg10[%c1_81, %c0_82, %c0_83] : memref<3x256x256xbf16, #tpu.memory_space<vmem>>, vector<1x256x256xbf16>
    %155 = vector.shape_cast %154 : vector<1x256x256xbf16> to vector<256x256xbf16>
    %cst_84 = arith.constant dense<0.000000e+00> : vector<16x256xf32>
    %156 = tpu.matmul %150, %155, %cst_84 {dimension_numbers = #tpu.dot_dimension_numbers<[1], [0], [0], [1], [0, 0, 1, 1], [], []>} : vector<16x256xbf16>, vector<256x256xbf16>, vector<16x256xf32> -> vector<16x256xf32>
    %157 = arith.addf %153, %156 : vector<16x256xf32>
    %c2_85 = arith.constant 2 : index
    %c0_86 = arith.constant 0 : index
    %c0_87 = arith.constant 0 : index
    %158 = vector.load %arg10[%c2_85, %c0_86, %c0_87] : memref<3x256x256xbf16, #tpu.memory_space<vmem>>, vector<1x256x256xbf16>
    %159 = vector.shape_cast %158 : vector<1x256x256xbf16> to vector<256x256xbf16>
    %cst_88 = arith.constant dense<0.000000e+00> : vector<16x256xf32>
    %160 = tpu.matmul %149, %159, %cst_88 {dimension_numbers = #tpu.dot_dimension_numbers<[1], [0], [0], [1], [0, 0, 1, 1], [], []>} : vector<16x256xbf16>, vector<256x256xbf16>, vector<16x256xf32> -> vector<16x256xf32>
    %161 = arith.addf %157, %160 : vector<16x256xf32>
    %c0_89 = arith.constant 0 : index
    %c0_90 = arith.constant 0 : index
    %162 = vector.load %arg11[%c0_89, %c0_90] : memref<1x256xf32, #tpu.memory_space<vmem>>, vector<1x256xf32>
    %163 = vector.broadcast %162 : vector<1x256xf32> to vector<16x256xf32>
    %164 = arith.addf %161, %163 : vector<16x256xf32>
    %cst_91 = arith.constant 0.000000e+00 : f32
    %165 = vector.broadcast %cst_91 : f32 to vector<16x256xf32>
    %166 = arith.maximumf %164, %165 : vector<16x256xf32>
    %167 = arith.truncf %166 : vector<16x256xf32> to vector<16x256xbf16>
    %c0_92 = arith.constant 0 : index
    %c0_93 = arith.constant 0 : index
    %168 = vector.load %arg12[%c0_92, %c0_93] : memref<256x256xbf16, #tpu.memory_space<vmem>>, vector<256x256xbf16>
    %cst_94 = arith.constant dense<0.000000e+00> : vector<16x256xf32>
    %169 = tpu.matmul %167, %168, %cst_94 {dimension_numbers = #tpu.dot_dimension_numbers<[1], [0], [0], [1], [0, 0, 1, 1], [], []>} : vector<16x256xbf16>, vector<256x256xbf16>, vector<16x256xf32> -> vector<16x256xf32>
    %c0_95 = arith.constant 0 : index
    %c0_96 = arith.constant 0 : index
    %170 = vector.load %arg13[%c0_95, %c0_96] : memref<1x256xf32, #tpu.memory_space<vmem>>, vector<1x256xf32>
    %171 = vector.broadcast %170 : vector<1x256xf32> to vector<16x256xf32>
    %172 = arith.addf %169, %171 : vector<16x256xf32>
    %cst_97 = arith.constant 0.000000e+00 : f32
    %173 = vector.broadcast %cst_97 : f32 to vector<16x256xf32>
    %174 = arith.maximumf %172, %173 : vector<16x256xf32>
    %175 = arith.truncf %174 : vector<16x256xf32> to vector<16x256xbf16>
    %c0_98 = arith.constant 0 : index
    %c0_99 = arith.constant 0 : index
    %176 = vector.load %arg14[%c0_98, %c0_99] : memref<256x128xbf16, #tpu.memory_space<vmem>>, vector<256x128xbf16>
    %cst_100 = arith.constant dense<0.000000e+00> : vector<16x128xf32>
    %177 = tpu.matmul %175, %176, %cst_100 {dimension_numbers = #tpu.dot_dimension_numbers<[1], [0], [0], [1], [0, 0, 1, 1], [], []>} : vector<16x256xbf16>, vector<256x128xbf16>, vector<16x128xf32> -> vector<16x128xf32>
    %c0_101 = arith.constant 0 : index
    %c0_102 = arith.constant 0 : index
    %178 = vector.load %arg15[%c0_101, %c0_102] : memref<1x128xf32, #tpu.memory_space<vmem>>, vector<1x128xf32>
    %179 = vector.broadcast %178 : vector<1x128xf32> to vector<16x128xf32>
    %180 = arith.addf %177, %179 : vector<16x128xf32>
    %c0_103 = arith.constant 0 : index
    %c0_104 = arith.constant 0 : index
    %181 = vector.load %arg16[%c0_103, %c0_104] : memref<16x128xf32, #tpu.memory_space<vmem>>, vector<16x128xf32>
    tpu.vector_store %arg16[%c0_103, %c0_104], %180 {strides = array<i32>} : memref<16x128xf32, #tpu.memory_space<vmem>>, vector<16x128xf32>,
    return
  }
  func.func @transform_0(%arg0: i32) -> (i32, i32) {
    %c0_i32 = arith.constant 0 : i32
    %c0_i32_0 = arith.constant 0 : i32
    return %arg0, %c0_i32 : i32, i32
  }
  func.func @transform_1(%arg0: i32) -> (i32, i32, i32) {
    %c0_i32 = arith.constant 0 : i32
    %c0_i32_0 = arith.constant 0 : i32
    %c0_i32_1 = arith.constant 0 : i32
    %c0_i32_2 = arith.constant 0 : i32
    return %c0_i32, %c0_i32_0, %c0_i32_1 : i32, i32, i32
  }
  func.func @transform_2(%arg0: i32) -> (i32, i32) {
    %c0_i32 = arith.constant 0 : i32
    %c0_i32_0 = arith.constant 0 : i32
    %c0_i32_1 = arith.constant 0 : i32
    return %c0_i32, %c0_i32_0 : i32, i32
  }
  func.func @transform_3(%arg0: i32) -> (i32, i32, i32) {
    %c0_i32 = arith.constant 0 : i32
    %c0_i32_0 = arith.constant 0 : i32
    %c0_i32_1 = arith.constant 0 : i32
    %c0_i32_2 = arith.constant 0 : i32
    return %c0_i32, %c0_i32_0, %c0_i32_1 : i32, i32, i32
  }
  func.func @transform_4(%arg0: i32) -> (i32, i32) {
    %c0_i32 = arith.constant 0 : i32
    %c0_i32_0 = arith.constant 0 : i32
    %c0_i32_1 = arith.constant 0 : i32
    return %c0_i32, %c0_i32_0 : i32, i32
  }
  func.func @transform_5(%arg0: i32) -> (i32, i32, i32) {
    %c0_i32 = arith.constant 0 : i32
    %c0_i32_0 = arith.constant 0 : i32
    %c0_i32_1 = arith.constant 0 : i32
    %c0_i32_2 = arith.constant 0 : i32
    return %c0_i32, %c0_i32_0, %c0_i32_1 : i32, i32, i32
  }
  func.func @transform_6(%arg0: i32) -> (i32, i32) {
    %c0_i32 = arith.constant 0 : i32
    %c0_i32_0 = arith.constant 0 : i32
    %c0_i32_1 = arith.constant 0 : i32
    return %c0_i32, %c0_i32_0 : i32, i32
  }
  func.func @transform_7(%arg0: i32) -> (i32, i32, i32) {
    %c0_i32 = arith.constant 0 : i32
    %c0_i32_0 = arith.constant 0 : i32
    %c0_i32_1 = arith.constant 0 : i32
    %c0_i32_2 = arith.constant 0 : i32
    return %c0_i32, %c0_i32_0, %c0_i32_1 : i32, i32, i32
  }
  func.func @transform_8(%arg0: i32) -> (i32, i32) {
    %c0_i32 = arith.constant 0 : i32
    %c0_i32_0 = arith.constant 0 : i32
    %c0_i32_1 = arith.constant 0 : i32
    return %c0_i32, %c0_i32_0 : i32, i32
  }
  func.func @transform_9(%arg0: i32) -> (i32, i32, i32) {
    %c0_i32 = arith.constant 0 : i32
    %c0_i32_0 = arith.constant 0 : i32
    %c0_i32_1 = arith.constant 0 : i32
    %c0_i32_2 = arith.constant 0 : i32
    return %c0_i32, %c0_i32_0, %c0_i32_1 : i32, i32, i32
  }
  func.func @transform_10(%arg0: i32) -> (i32, i32) {
    %c0_i32 = arith.constant 0 : i32
    %c0_i32_0 = arith.constant 0 : i32
    %c0_i32_1 = arith.constant 0 : i32
    return %c0_i32, %c0_i32_0 : i32, i32
  }
  func.func @transform_11(%arg0: i32) -> (i32, i32) {
    %c0_i32 = arith.constant 0 : i32
    %c0_i32_0 = arith.constant 0 : i32
    %c0_i32_1 = arith.constant 0 : i32
    return %c0_i32, %c0_i32_0 : i32, i32
  }
  func.func @transform_12(%arg0: i32) -> (i32, i32) {
    %c0_i32 = arith.constant 0 : i32
    %c0_i32_0 = arith.constant 0 : i32
    %c0_i32_1 = arith.constant 0 : i32
    return %c0_i32, %c0_i32_0 : i32, i32
  }
  func.func @transform_13(%arg0: i32) -> (i32, i32) {
    %c0_i32 = arith.constant 0 : i32
    %c0_i32_0 = arith.constant 0 : i32
    %c0_i32_1 = arith.constant 0 : i32
    return %c0_i32, %c0_i32_0 : i32, i32
  }
  func.func @transform_14(%arg0: i32) -> (i32, i32) {
    %c0_i32 = arith.constant 0 : i32
    %c0_i32_0 = arith.constant 0 : i32
    %c0_i32_1 = arith.constant 0 : i32
    return %c0_i32, %c0_i32_0 : i32, i32
  }
  func.func @transform_15(%arg0: i32) -> (i32, i32) {
    %c0_i32 = arith.constant 0 : i32
    %c0_i32_0 = arith.constant 0 : i32
    return %arg0, %c0_i32 : i32, i32
  }
}

</mosaic_0001>

<llo_original>
// kernel: tpu_custom_call.1
$region0: #{tpu_custom_call.1}
  #allocation0 [shape = 'u32[]', space=smem, size = 0x4, offset = 0x4, fixed_abs, tag = 'smem constant byte address 0x4 - core index']
  #allocation1 [shape = 'u32[144,128]{1,0:T(1,128)}', space=vmem, size = 0x12000, scoped, tag = 'internal scratch']
  %s0 = inlined_call_operand.hbm [shape: f32[16,32], index: 0, kind: input, shape index: {}]
  %s1 = inlined_call_operand.hbm [shape: bf16[3,32,64], index: 1, kind: input, shape index: {}]
  %s2 = inlined_call_operand.vmem [shape: f32[1,64], index: 2, kind: input, shape index: {}]
  %s3 = inlined_call_operand.hbm [shape: bf16[3,64,128], index: 3, kind: input, shape index: {}]
  %s4 = inlined_call_operand.hbm [shape: f32[1,128], index: 4, kind: input, shape index: {}]
  %s5 = inlined_call_operand.hbm [shape: bf16[3,128,128], index: 5, kind: input, shape index: {}]
  %s6 = inlined_call_operand.vmem [shape: f32[1,128], index: 6, kind: input, shape index: {}]
  %s7 = inlined_call_operand.hbm [shape: bf16[3,128,256], index: 7, kind: input, shape index: {}]
  %s8 = inlined_call_operand.vmem [shape: f32[1,256], index: 8, kind: input, shape index: {}]
  %s9 = inlined_call_operand.hbm [shape: bf16[3,256,256], index: 9, kind: input, shape index: {}]
  %s10 = inlined_call_operand.vmem [shape: f32[1,256], index: 10, kind: input, shape index: {}]
  %s11 = inlined_call_operand.hbm [shape: bf16[256,256], index: 11, kind: input, shape index: {}]
  %s12 = inlined_call_operand.vmem [shape: f32[1,256], index: 12, kind: input, shape index: {}]
  %s13 = inlined_call_operand.hbm [shape: bf16[256,128], index: 13, kind: input, shape index: {}]
  %s14 = inlined_call_operand.vmem [shape: f32[1,128], index: 14, kind: input, shape index: {}]
  %s15 = inlined_call_operand.hbm [shape: f32[16,128], index: 15, kind: output, shape index: {}]
  %s16 = sld [smem:[#allocation0]]
  $region106: #{tpu_custom_call.1} parent=0
    _
  %s18 = ssub.s32 1, %s16
  %s19 = scalar_select 0, %s18, %s16
  $region1: #{tpu_custom_call.1} parent=0
    #allocation2 [shape = 'u8[8192]{0}', space=vmem, size = 0x2000, scoped, tag = 'input window, operand 0, single buffered']
    #allocation3 [shape = 's32[1]{0}', space=sflag, size = 0x4, scoped, tag = 'scoped memory for tpu_custom_call.1']
    #allocation4 [shape = 's32[1]{0}', space=sflag, size = 0x4, scoped, tag = 'scoped memory for tpu_custom_call.1']
    #allocation5 [shape = 'u8[24576]{0}', space=vmem, size = 0x6000, scoped, tag = 'input window, operand 1, single buffered']
    #allocation6 [shape = 's32[1]{0}', space=sflag, size = 0x4, scoped, tag = 'scoped memory for tpu_custom_call.1']
    #allocation7 [shape = 'u8[49152]{0}', space=vmem, size = 0xc000, scoped, tag = 'input window, operand 3, single buffered']
    #allocation8 [shape = 'u8[512]{0}', space=vmem, size = 0x400, scoped, tag = 'input window, operand 4, single buffered']
    #allocation9 [shape = 's32[1]{0}', space=sflag, size = 0x4, scoped, tag = 'scoped memory for tpu_custom_call.1']
    #allocation10 [shape = 'u8[98304]{0}', space=vmem, size = 0x18000, scoped, tag = 'input window, operand 5, single buffered']
    #allocation11 [shape = 'u8[196608]{0}', space=vmem, size = 0x30000, scoped, tag = 'input window, operand 7, single buffered']
    #allocation12 [shape = 's32[1]{0}', space=sflag, size = 0x4, scoped, tag = 'scoped memory for tpu_custom_call.1']
    #allocation13 [shape = 'u8[393216]{0}', space=vmem, size = 0x60000, scoped, tag = 'input window, operand 9, single buffered']
    #allocation14 [shape = 'u8[131072]{0}', space=vmem, size = 0x20000, scoped, tag = 'input window, operand 11, single buffered']
    #allocation15 [shape = 's32[1]{0}', space=sflag, size = 0x4, scoped, tag = 'scoped memory for tpu_custom_call.1']
    #allocation16 [shape = 'u8[65536]{0}', space=vmem, size = 0x10000, scoped, tag = 'input window, operand 13, single buffered']
    #allocation17 [shape = 'u8[8192]{0}', space=vmem, size = 0x2000, scoped, tag = 'output window, operand 0, single buffered']
    %20 = vsyncpa [#allocation3], 0
    %21 = vsyncpa [#allocation6], 0
    %22 = vsyncpa [#allocation9], 0
    %23 = vsyncpa [#allocation12], 0
    %24 = vsyncpa [#allocation15], 0
    %25 = vsyncpa [#allocation4], 0
    // Predicated region
    $region2: #{tpu_custom_call.1} parent=1 // pred_check
      _
    $region3: #{tpu_custom_call.1} parent=1 // pred_check_branch
      %27 = sbr.rel (0) target = $region5
    $region4: #{tpu_custom_call.1} parent=1 // pred_region
      %s29 = ssub.s32 256, 256
      %30 = vsyncadd [#allocation3], %s29
      %s31 = sshll.u32 [#allocation2], 4
      %s32 = int_to_ptr.vmem [resolvable:$true] %s31
      %37 = dma.hbm_to_vmem [thread:$0]  %s0, 256, %s32, [#allocation3], 128, 128, 8
    $region5: #{tpu_custom_call.1} parent=1 // pred_fallthru
      _
    // Predicated region
    $region6: #{tpu_custom_call.1} parent=1 // pred_check
      _
    $region7: #{tpu_custom_call.1} parent=1 // pred_check_branch
      %39 = sbr.rel (0) target = $region9
    $region8: #{tpu_custom_call.1} parent=1 // pred_region
      %s41 = ssub.s32 768, 768
      %42 = vsyncadd [#allocation6], %s41
      %s43 = sshll.u32 [#allocation5], 4
      %s44 = int_to_ptr.vmem [resolvable:$true] %s43
      %49 = dma.hbm_to_vmem [thread:$0]  %s1, 768, %s44, [#allocation6], 64, 64, 4
    $region9: #{tpu_custom_call.1} parent=1 // pred_fallthru
      _
    // Predicated region
    $region10: #{tpu_custom_call.1} parent=1 // pred_check
      _
    $region11: #{tpu_custom_call.1} parent=1 // pred_check_branch
      %51 = sbr.rel (0) target = $region13
    $region12: #{tpu_custom_call.1} parent=1 // pred_region
      _
    $region13: #{tpu_custom_call.1} parent=1 // pred_fallthru
      _
    // Predicated region
    $region14: #{tpu_custom_call.1} parent=1 // pred_check
      _
    $region15: #{tpu_custom_call.1} parent=1 // pred_check_branch
      %53 = sbr.rel (0) target = $region17
    $region16: #{tpu_custom_call.1} parent=1 // pred_region
      %s55 = ssub.s32 1536, 1536
      %56 = vsyncadd [#allocation6], %s55
      %s57 = sshll.u32 [#allocation7], 4
      %s58 = int_to_ptr.vmem [resolvable:$true] %s57
      %63 = dma.hbm_to_vmem [thread:$0]  %s3, 1536, %s58, [#allocation6], 64, 64, 4
    $region17: #{tpu_custom_call.1} parent=1 // pred_fallthru
      _
    // Predicated region
    $region18: #{tpu_custom_call.1} parent=1 // pred_check
      _
    $region19: #{tpu_custom_call.1} parent=1 // pred_check_branch
      %65 = sbr.rel (0) target = $region21
    $region20: #{tpu_custom_call.1} parent=1 // pred_region
      %s67 = ssub.s32 16, 16
      %68 = vsyncadd [#allocation9], %s67
      %s70 = sshll.u32 [#allocation8], 4
      %s71 = int_to_ptr.vmem [resolvable:$true] %s70
      %73 = dma.hbm_to_vmem [thread:$0]  %s4, 16, %s71, [#allocation9]
    $region21: #{tpu_custom_call.1} parent=1 // pred_fallthru
      _
    // Predicated region
    $region22: #{tpu_custom_call.1} parent=1 // pred_check
      _
    $region23: #{tpu_custom_call.1} parent=1 // pred_check_branch
      %75 = sbr.rel (0) target = $region25
    $region24: #{tpu_custom_call.1} parent=1 // pred_region
      %s77 = ssub.s32 3072, 3072
      %78 = vsyncadd [#allocation9], %s77
      %s79 = sshll.u32 [#allocation10], 4
      %s80 = int_to_ptr.vmem [resolvable:$true] %s79
      %85 = dma.hbm_to_vmem [thread:$0]  %s5, 3072, %s80, [#allocation9], 64, 64, 4
    $region25: #{tpu_custom_call.1} parent=1 // pred_fallthru
      _
    // Predicated region
    $region26: #{tpu_custom_call.1} parent=1 // pred_check
      _
    $region27: #{tpu_custom_call.1} parent=1 // pred_check_branch
      %87 = sbr.rel (0) target = $region29
    $region28: #{tpu_custom_call.1} parent=1 // pred_region
      _
    $region29: #{tpu_custom_call.1} parent=1 // pred_fallthru
      _
    // Predicated region
    $region30: #{tpu_custom_call.1} parent=1 // pred_check
      _
    $region31: #{tpu_custom_call.1} parent=1 // pred_check_branch
      %89 = sbr.rel (0) target = $region33
    $region32: #{tpu_custom_call.1} parent=1 // pred_region
      %s91 = ssub.s32 6144, 6144
      %92 = vsyncadd [#allocation12], %s91
      %s93 = sshll.u32 [#allocation11], 4
      %s94 = int_to_ptr.vmem [resolvable:$true] %s93
      %99 = dma.hbm_to_vmem [thread:$0]  %s7, 6144, %s94, [#allocation12], 128, 128, 8
    $region33: #{tpu_custom_call.1} parent=1 // pred_fallthru
      _
    // Predicated region
    $region34: #{tpu_custom_call.1} parent=1 // pred_check
      _
    $region35: #{tpu_custom_call.1} parent=1 // pred_check_branch
      %101 = sbr.rel (0) target = $region37
    $region36: #{tpu_custom_call.1} parent=1 // pred_region
      _
    $region37: #{tpu_custom_call.1} parent=1 // pred_fallthru
      _
    // Predicated region
    $region38: #{tpu_custom_call.1} parent=1 // pred_check
      _
    $region39: #{tpu_custom_call.1} parent=1 // pred_check_branch
      %103 = sbr.rel (0) target = $region41
    $region40: #{tpu_custom_call.1} parent=1 // pred_region
      %s105 = ssub.s32 12288, 12288
      %106 = vsyncadd [#allocation12], %s105
      %s107 = sshll.u32 [#allocation13], 4
      %s108 = int_to_ptr.vmem [resolvable:$true] %s107
      %113 = dma.hbm_to_vmem [thread:$0]  %s9, 12288, %s108, [#allocation12], 128, 128, 8
    $region41: #{tpu_custom_call.1} parent=1 // pred_fallthru
      _
    // Predicated region
    $region42: #{tpu_custom_call.1} parent=1 // pred_check
      _
    $region43: #{tpu_custom_call.1} parent=1 // pred_check_branch
      %115 = sbr.rel (0) target = $region45
    $region44: #{tpu_custom_call.1} parent=1 // pred_region
      _
    $region45: #{tpu_custom_call.1} parent=1 // pred_fallthru
      _
    // Predicated region
    $region46: #{tpu_custom_call.1} parent=1 // pred_check
      _
    $region47: #{tpu_custom_call.1} parent=1 // pred_check_branch
      %117 = sbr.rel (0) target = $region49
    $region48: #{tpu_custom_call.1} parent=1 // pred_region
      %s119 = ssub.s32 4096, 4096
      %120 = vsyncadd [#allocation15], %s119
      %s121 = sshll.u32 [#allocation14], 4
      %s122 = int_to_ptr.vmem [resolvable:$true] %s121
      %127 = dma.hbm_to_vmem [thread:$0]  %s11, 4096, %s122, [#allocation15], 128, 128, 8
    $region49: #{tpu_custom_call.1} parent=1 // pred_fallthru
      _
    // Predicated region
    $region50: #{tpu_custom_call.1} parent=1 // pred_check
      _
    $region51: #{tpu_custom_call.1} parent=1 // pred_check_branch
      %129 = sbr.rel (0) target = $region53
    $region52: #{tpu_custom_call.1} parent=1 // pred_region
      _
    $region53: #{tpu_custom_call.1} parent=1 // pred_fallthru
      _
    // Predicated region
    $region54: #{tpu_custom_call.1} parent=1 // pred_check
      _
    $region55: #{tpu_custom_call.1} parent=1 // pred_check_branch
      %131 = sbr.rel (0) target = $region57
    $region56: #{tpu_custom_call.1} parent=1 // pred_region
      %s133 = ssub.s32 2048, 2048
      %134 = vsyncadd [#allocation15], %s133
      %s135 = sshll.u32 [#allocation16], 4
      %s136 = int_to_ptr.vmem [resolvable:$true] %s135
      %141 = dma.hbm_to_vmem [thread:$0]  %s13, 2048, %s136, [#allocation15], 64, 64, 4
    $region57: #{tpu_custom_call.1} parent=1 // pred_fallthru
      _
    // Predicated region
    $region58: #{tpu_custom_call.1} parent=1 // pred_check
      _
    $region59: #{tpu_custom_call.1} parent=1 // pred_check_branch
      %143 = sbr.rel (0) target = $region61
    $region60: #{tpu_custom_call.1} parent=1 // pred_region
      _
    $region61: #{tpu_custom_call.1} parent=1 // pred_fallthru
      _
    // Predicated region
    $region62: #{tpu_custom_call.1} parent=1 // pred_check
      _
    $region63: #{tpu_custom_call.1} parent=1 // pred_check_branch
      %145 = sbr.rel (0) target = $region65
    $region64: #{tpu_custom_call.1} parent=1 // pred_region
      %146 = dma.done [#allocation3], 256
    $region65: #{tpu_custom_call.1} parent=1 // pred_fallthru
      _
    // Predicated region
    $region66: #{tpu_custom_call.1} parent=1 // pred_check
      _
    $region67: #{tpu_custom_call.1} parent=1 // pred_check_branch
      %148 = sbr.rel (0) target = $region69
    $region68: #{tpu_custom_call.1} parent=1 // pred_region
      %149 = dma.done [#allocation6], 768
    $region69: #{tpu_custom_call.1} parent=1 // pred_fallthru
      _
    // Predicated region
    $region70: #{tpu_custom_call.1} parent=1 // pred_check
      _
    $region71: #{tpu_custom_call.1} parent=1 // pred_check_branch
      %151 = sbr.rel (0) target = $region73
    $region72: #{tpu_custom_call.1} parent=1 // pred_region
      %152 = dma.done [#allocation6], 1536
    $region73: #{tpu_custom_call.1} parent=1 // pred_fallthru
      _
    // Predicated region
    $region74: #{tpu_custom_call.1} parent=1 // pred_check
      _
    $region75: #{tpu_custom_call.1} parent=1 // pred_check_branch
      %154 = sbr.rel (0) target = $region77
    $region76: #{tpu_custom_call.1} parent=1 // pred_region
      %155 = dma.done [#allocation9], 16
    $region77: #{tpu_custom_call.1} parent=1 // pred_fallthru
      _
    // Predicated region
    $region78: #{tpu_custom_call.1} parent=1 // pred_check
      _
    $region79: #{tpu_custom_call.1} parent=1 // pred_check_branch
      %157 = sbr.rel (0) target = $region81
    $region80: #{tpu_custom_call.1} parent=1 // pred_region
      %158 = dma.done [#allocation9], 3072
    $region81: #{tpu_custom_call.1} parent=1 // pred_fallthru
      _
    // Predicated region
    $region82: #{tpu_custom_call.1} parent=1 // pred_check
      _
    $region83: #{tpu_custom_call.1} parent=1 // pred_check_branch
      %160 = sbr.rel (0) target = $region85
    $region84: #{tpu_custom_call.1} parent=1 // pred_region
      %161 = dma.done [#allocation12], 6144
    $region85: #{tpu_custom_call.1} parent=1 // pred_fallthru
      _
    // Predicated region
    $region86: #{tpu_custom_call.1} parent=1 // pred_check
      _
    $region87: #{tpu_custom_call.1} parent=1 // pred_check_branch
      %163 = sbr.rel (0) target = $region89
    $region88: #{tpu_custom_call.1} parent=1 // pred_region
      %164 = dma.done [#allocation12], 12288
    $region89: #{tpu_custom_call.1} parent=1 // pred_fallthru
      _
    // Predicated region
    $region90: #{tpu_custom_call.1} parent=1 // pred_check
      _
    $region91: #{tpu_custom_call.1} parent=1 // pred_check_branch
      %166 = sbr.rel (0) target = $region93
    $region92: #{tpu_custom_call.1} parent=1 // pred_region
      %167 = dma.done [#allocation15], 4096
    $region93: #{tpu_custom_call.1} parent=1 // pred_fallthru
      _
    // Predicated region
    $region94: #{tpu_custom_call.1} parent=1 // pred_check
      _
    $region95: #{tpu_custom_call.1} parent=1 // pred_check_branch
      %169 = sbr.rel (0) target = $region97
    $region96: #{tpu_custom_call.1} parent=1 // pred_region
      %170 = dma.done [#allocation15], 2048
    $region97: #{tpu_custom_call.1} parent=1 // pred_fallthru
      _
    %v172 = vld [vmem:[#allocation2] sm:$0xff]
    %v173 = vld [vmem:[#allocation2 + $0x8] sm:$0xff]
    %v174 = vlaneseq
    %v175 = vshrl.u32 %v174, 7
    %v176 = vadd.s32 %v175, 8
    %vm177 = vcmp.lt.s32.totalorder %v175, 0
    %v178 = vsub.s32 0, %v175
    %v179 = vsel %vm177, %v178, %v175
    %v180 = vshrl.u32 %v179, 3
    %v181 = vand.u32 %v179, 7
    %v182 = vsub.s32 0, %v181
    %v183 = vsel %vm177, %v182, %v181
    %vm184 = vcmp.lt.s32.totalorder %v176, 0
    %v185 = vsub.s32 0, %v176
    %v186 = vsel %vm184, %v185, %v176
    %v187 = vshrl.u32 %v186, 3
    %v188 = vand.u32 %v186, 7
    %v189 = vsub.s32 0, %v188
    %v190 = vsel %vm184, %v189, %v188
    %vm191 = vcmp.ne.s32.totalorder %v183, 0
    %vm192 = vcmp.ne.s32.totalorder %v190, 0
    %vm193 = vcmp.lt.s32.totalorder %v183, 0
    %vm194 = vcmp.lt.s32.totalorder %v190, 0
    %vm195 = vmand %vm193, %vm191
    %vm196 = vmand %vm194, %vm192
    %v197 = vadd.s32 %v183, 8
    %v198 = vadd.s32 %v190, 8
    %v199 = vsel %vm195, %v197, %v183
    %v200 = vsel %vm196, %v198, %v190
    %vm201 = vcmp.ne.s32.totalorder %v199, 0
    %vm202 = vcmp.ne.s32.totalorder %v200, 0
    %v203 = vsel %vm201, 1, 0
    %v204 = vsel %vm202, 1, 0
    %v205 = vcvt.s32.f32 %v203
    %v206 = vcvt.s32.f32 %v204
    %vm207 = vcmp.ne.s32.totalorder %v199, 7
    %vm208 = vcmp.ne.s32.totalorder %v200, 7
    %v209 = vsel %vm207, 1, 0
    %v210 = vsel %vm208, 1, 0
    %v211 = vcvt.s32.f32 %v209
    %v212 = vcvt.s32.f32 %v210
    %v213 = vrot.slane %v172, 7
    %v214 = vrot.slane %v173, 7
    %vm215 = vcmp.lt.s32.totalorder %v175, 1
    %v216 = vsel %vm215, %v213, %v214
    %v217 = vsel %vm215, %v214, %v213
    %v218 = vmul.f32 %v217, %v205
    %v219 = vmul.f32 %v216, %v206
    %v220 = vpack.c.bf16 %v219, %v218
    %v221 = vrot.slane %v172, 1
    %v222 = vrot.slane %v173, 1
    %vm223 = vcmp.lt.s32.totalorder %v175, 7
    %v224 = vsel %vm223, %v221, %v222
    %v225 = vsel %vm223, %v222, %v221
    %v226 = vmul.f32 %v224, %v211
    %v227 = vmul.f32 %v225, %v212
    %v228 = vpack.c.bf16 %v227, %v226
    %v229 = vpack.c.bf16 %v173, %v172
    %v230 = vld [vmem:[#allocation5] sm:$0xf]
    %v231 = vld [vmem:[#allocation5 + $0x4] sm:$0xf]
    %v232 = vld [vmem:[#allocation5 + $0x8] sm:$0xf]
    %v233 = vld [vmem:[#allocation5 + $0xc] sm:$0xf]
    %s234 = scalar_lea.vmem [#allocation5], 16
    %v235 = vld [vmem:[%s234] sm:$0xf]
    %v236 = vld [vmem:[%s234 + $0x4] sm:$0xf]
    %v237 = vld [vmem:[%s234 + $0x8] sm:$0xf]
    %v238 = vld [vmem:[%s234 + $0xc] sm:$0xf]
    %v243 = vunpack.c.l.b16 %v235
    %v244 = vunpack.c.l.b16 %v236
    %v245 = vunpack.c.l.b16 %v237
    %v246 = vunpack.c.l.b16 %v238
    %v247 = vpack.c.b16 %v244, %v243
    %v248 = vpack.c.b16 %v246, %v245
    %vm251 = vcmask 261120
    %v253 = vsel %vm251, %v229, 0
    %255 = vmatprep.subr.bf16.mxu0 0
    %256 = vmatpush1.bf16.msra.mxu0 0
    %257 = vmatprep.subr.bf16.mxu0 0
    %258 = vmatpush1.bf16.msra.mxu0 0
    %259 = vmatprep.subr.bf16.mxu0 0
    %260 = vmatpush1.bf16.msra.mxu0 0
    %261 = vmatprep.subr.bf16.mxu0 0
    %262 = vmatpush1.bf16.msra.mxu0 0
    %263 = vmatprep.subr.bf16.mxu0 0
    %264 = vmatpush1.bf16.msra.mxu0 0
    %265 = vmatprep.subr.bf16.mxu0 0
    %266 = vmatpush1.bf16.msra.mxu0 0
    %267 = vmatprep.subr.bf16.mxu0 0
    %268 = vmatpush1.bf16.msra.mxu0 %v248
    %269 = vmatprep.subr.bf16.mxu0 0
    %270 = vmatpush1.bf16.msra.mxu0 %v247
    %271 = vmatprep.subr.bf16.mxu0 0
    %272 = vmatpush2.bf16.msra.mxu0 0
    %273 = vmatprep.subr.bf16.mxu0 0
    %274 = vmatpush2.bf16.msra.mxu0 0
    %275 = vmatprep.subr.bf16.mxu0 0
    %276 = vmatpush2.bf16.msra.mxu0 0
    %277 = vmatprep.subr.bf16.mxu0 0
    %278 = vmatpush2.bf16.msra.mxu0 0
    %279 = vmatprep.subr.bf16.mxu0 0
    %280 = vmatpush2.bf16.msra.mxu0 0
    %281 = vmatprep.subr.bf16.mxu0 0
    %282 = vmatpush2.bf16.msra.mxu0 0
    %283 = vmatprep.subr.bf16.mxu0 0
    %284 = vmatpush2.bf16.msra.mxu0 0
    %285 = vmatprep.subr.bf16.mxu0 0
    %286 = vmatpush2.bf16.msra.mxu0 0
    %287 = vmatprep.mubr.bf16.mxu0 0
    %288 = vmatmul.mubr.bf16.gmra.mxu0 %v253
    %v289 = vpop.f32.mrf.mxu0
    %v290 = vadd.f32 0.0, %v289
    %v291 = vpop.f32.mrf.mxu0
    %v292 = vpop.f32.mrf.mxu0
    %v293 = vadd.f32 0.0, %v292
    %v294 = vpop.f32.mrf.mxu0
    %295 = vdwg.mxu0
    %v300 = vunpack.c.l.b16 %v230
    %v301 = vunpack.c.l.b16 %v231
    %v302 = vunpack.c.l.b16 %v232
    %v303 = vunpack.c.l.b16 %v233
    %v304 = vpack.c.b16 %v301, %v300
    %v305 = vpack.c.b16 %v303, %v302
    %v309 = vsel %vm251, %v220, 0
    %311 = vmatprep.subr.bf16.mxu0 0
    %312 = vmatpush1.bf16.msra.mxu0 0
    %313 = vmatprep.subr.bf16.mxu0 0
    %314 = vmatpush1.bf16.msra.mxu0 0
    %315 = vmatprep.subr.bf16.mxu0 0
    %316 = vmatpush1.bf16.msra.mxu0 0
    %317 = vmatprep.subr.bf16.mxu0 0
    %318 = vmatpush1.bf16.msra.mxu0 0
    %319 = vmatprep.subr.bf16.mxu0 0
    %320 = vmatpush1.bf16.msra.mxu0 0
    %321 = vmatprep.subr.bf16.mxu0 0
    %322 = vmatpush1.bf16.msra.mxu0 0
    %323 = vmatprep.subr.bf16.mxu0 0
    %324 = vmatpush1.bf16.msra.mxu0 %v305
    %325 = vmatprep.subr.bf16.mxu0 0
    %326 = vmatpush1.bf16.msra.mxu0 %v304
    %327 = vmatprep.subr.bf16.mxu0 0
    %328 = vmatpush2.bf16.msra.mxu0 0
    %329 = vmatprep.subr.bf16.mxu0 0
    %330 = vmatpush2.bf16.msra.mxu0 0
    %331 = vmatprep.subr.bf16.mxu0 0
    %332 = vmatpush2.bf16.msra.mxu0 0
    %333 = vmatprep.subr.bf16.mxu0 0
    %334 = vmatpush2.bf16.msra.mxu0 0
    %335 = vmatprep.subr.bf16.mxu0 0
    %336 = vmatpush2.bf16.msra.mxu0 0
    %337 = vmatprep.subr.bf16.mxu0 0
    %338 = vmatpush2.bf16.msra.mxu0 0
    %339 = vmatprep.subr.bf16.mxu0 0
    %340 = vmatpush2.bf16.msra.mxu0 0
    %341 = vmatprep.subr.bf16.mxu0 0
    %342 = vmatpush2.bf16.msra.mxu0 0
    %343 = vmatprep.mubr.bf16.mxu0 0
    %344 = vmatmul.mubr.bf16.gmra.mxu0 %v309
    %v345 = vpop.f32.mrf.mxu0
    %v346 = vadd.f32 %v290, %v345
    %v347 = vpop.f32.mrf.mxu0
    %v348 = vpop.f32.mrf.mxu0
    %v349 = vadd.f32 %v293, %v348
    %v350 = vpop.f32.mrf.mxu0
    %351 = vdwg.mxu0
    %s352 = scalar_lea.vmem [#allocation5], 32
    %v353 = vld [vmem:[%s352] sm:$0xf]
    %v354 = vld [vmem:[%s352 + $0x4] sm:$0xf]
    %v355 = vld [vmem:[%s352 + $0x8] sm:$0xf]
    %v356 = vld [vmem:[%s352 + $0xc] sm:$0xf]
    %v361 = vunpack.c.l.b16 %v353
    %v362 = vunpack.c.l.b16 %v354
    %v363 = vunpack.c.l.b16 %v355
    %v364 = vunpack.c.l.b16 %v356
    %v365 = vpack.c.b16 %v362, %v361
    %v366 = vpack.c.b16 %v364, %v363
    %v370 = vsel %vm251, %v228, 0
    %372 = vmatprep.subr.bf16.mxu0 0
    %373 = vmatpush1.bf16.msra.mxu0 0
    %374 = vmatprep.subr.bf16.mxu0 0
    %375 = vmatpush1.bf16.msra.mxu0 0
    %376 = vmatprep.subr.bf16.mxu0 0
    %377 = vmatpush1.bf16.msra.mxu0 0
    %378 = vmatprep.subr.bf16.mxu0 0
    %379 = vmatpush1.bf16.msra.mxu0 0
    %380 = vmatprep.subr.bf16.mxu0 0
    %381 = vmatpush1.bf16.msra.mxu0 0
    %382 = vmatprep.subr.bf16.mxu0 0
    %383 = vmatpush1.bf16.msra.mxu0 0
    %384 = vmatprep.subr.bf16.mxu0 0
    %385 = vmatpush1.bf16.msra.mxu0 %v366
    %386 = vmatprep.subr.bf16.mxu0 0
    %387 = vmatpush1.bf16.msra.mxu0 %v365
    %388 = vmatprep.subr.bf16.mxu0 0
    %389 = vmatpush2.bf16.msra.mxu0 0
    %390 = vmatprep.subr.bf16.mxu0 0
    %391 = vmatpush2.bf16.msra.mxu0 0
    %392 = vmatprep.subr.bf16.mxu0 0
    %393 = vmatpush2.bf16.msra.mxu0 0
    %394 = vmatprep.subr.bf16.mxu0 0
    %395 = vmatpush2.bf16.msra.mxu0 0
    %396 = vmatprep.subr.bf16.mxu0 0
    %397 = vmatpush2.bf16.msra.mxu0 0
    %398 = vmatprep.subr.bf16.mxu0 0
    %399 = vmatpush2.bf16.msra.mxu0 0
    %400 = vmatprep.subr.bf16.mxu0 0
    %401 = vmatpush2.bf16.msra.mxu0 0
    %402 = vmatprep.subr.bf16.mxu0 0
    %403 = vmatpush2.bf16.msra.mxu0 0
    %404 = vmatprep.mubr.bf16.mxu0 0
    %405 = vmatmul.mubr.bf16.gmra.mxu0 %v370
    %v406 = vpop.f32.mrf.mxu0
    %v407 = vadd.f32 0.0, %v406
    %v408 = vpop.f32.mrf.mxu0
    %v409 = vpop.f32.mrf.mxu0
    %v410 = vadd.f32 0.0, %v409
    %v411 = vpop.f32.mrf.mxu0
    %412 = vdwg.mxu0
    %v413 = vadd.f32 %v346, %v407
    %v414 = vadd.f32 %v349, %v410
    %v415 = vld [vmem:[%s2] sm:$0x1]
    %v417 = vlaneseq
    %v418 = vshrl.u32 %v417, 7
    %v419 = vsub.s32 0, %v418
    %v420 = vrot.slane %v415, %v419
    %v422 = vadd.f32 %v413, %v420
    %v423 = vadd.f32 %v414, %v420
    %v424 = vmax.f32 %v422, 0.0
    %v425 = vmax.f32 %v423, 0.0
    %v426 = vrot.slane %v424, 7
    %v427 = vrot.slane %v425, 7
    %v428 = vsel %vm215, %v426, %v427
    %v429 = vsel %vm215, %v427, %v426
    %v430 = vmul.f32 %v429, %v205
    %v431 = vmul.f32 %v428, %v206
    %v432 = vpack.c.bf16 %v431, %v430
    %v433 = vrot.slane %v424, 1
    %v434 = vrot.slane %v425, 1
    %v435 = vsel %vm223, %v433, %v434
    %v436 = vsel %vm223, %v434, %v433
    %v437 = vmul.f32 %v435, %v211
    %v438 = vmul.f32 %v436, %v212
    %v439 = vpack.c.bf16 %v438, %v437
    %v440 = vpack.c.bf16 %v425, %v424
    %v441 = vld [vmem:[#allocation7] sm:$0xf]
    %v442 = vld [vmem:[#allocation7 + $0x4] sm:$0xf]
    %v443 = vld [vmem:[#allocation7 + $0x8] sm:$0xf]
    %v444 = vld [vmem:[#allocation7 + $0xc] sm:$0xf]
    %v445 = vld [vmem:[#allocation7 + $0x10] sm:$0xf]
    %v446 = vld [vmem:[#allocation7 + $0x14] sm:$0xf]
    %v447 = vld [vmem:[#allocation7 + $0x18] sm:$0xf]
    %v448 = vld [vmem:[#allocation7 + $0x1c] sm:$0xf]
    %s449 = scalar_lea.vmem [#allocation7], 32
    %v450 = vld [vmem:[%s449] sm:$0xf]
    %v451 = vld [vmem:[%s449 + $0x4] sm:$0xf]
    %v452 = vld [vmem:[%s449 + $0x8] sm:$0xf]
    %v453 = vld [vmem:[%s449 + $0xc] sm:$0xf]
    %v454 = vld [vmem:[%s449 + $0x10] sm:$0xf]
    %v455 = vld [vmem:[%s449 + $0x14] sm:$0xf]
    %v456 = vld [vmem:[%s449 + $0x18] sm:$0xf]
    %v457 = vld [vmem:[%s449 + $0x1c] sm:$0xf]
    %v466 = vunpack.c.l.b16 %v450
    %v467 = vunpack.c.l.b16 %v451
    %v468 = vunpack.c.l.b16 %v452
    %v469 = vunpack.c.l.b16 %v453
    %v470 = vunpack.c.l.b16 %v454
    %v471 = vunpack.c.l.b16 %v455
    %v472 = vunpack.c.l.b16 %v456
    %v473 = vunpack.c.l.b16 %v457
    %v474 = vpack.c.b16 %v467, %v466
    %v475 = vpack.c.b16 %v469, %v468
    %v476 = vpack.c.b16 %v471, %v470
    %v477 = vpack.c.b16 %v473, %v472
    %vm482 = vcmask 523264
    %v484 = vsel %vm482, %v440, 0
    %486 = vmatprep.subr.bf16.mxu0 0
    %487 = vmatpush1.bf16.msra.mxu0 0
    %488 = vmatprep.subr.bf16.mxu0 0
    %489 = vmatpush1.bf16.msra.mxu0 0
    %490 = vmatprep.subr.bf16.mxu0 0
    %491 = vmatpush1.bf16.msra.mxu0 0
    %492 = vmatprep.subr.bf16.mxu0 0
    %493 = vmatpush1.bf16.msra.mxu0 0
    %494 = vmatprep.subr.bf16.mxu0 0
    %495 = vmatpush1.bf16.msra.mxu0 %v477
    %496 = vmatprep.subr.bf16.mxu0 0
    %497 = vmatpush1.bf16.msra.mxu0 %v476
    %498 = vmatprep.subr.bf16.mxu0 0
    %499 = vmatpush1.bf16.msra.mxu0 %v475
    %500 = vmatprep.subr.bf16.mxu0 0
    %501 = vmatpush1.bf16.msra.mxu0 %v474
    %502 = vmatprep.subr.bf16.mxu0 0
    %503 = vmatpush2.bf16.msra.mxu0 0
    %504 = vmatprep.subr.bf16.mxu0 0
    %505 = vmatpush2.bf16.msra.mxu0 0
    %506 = vmatprep.subr.bf16.mxu0 0
    %507 = vmatpush2.bf16.msra.mxu0 0
    %508 = vmatprep.subr.bf16.mxu0 0
    %509 = vmatpush2.bf16.msra.mxu0 0
    %510 = vmatprep.subr.bf16.mxu0 0
    %511 = vmatpush2.bf16.msra.mxu0 0
    %512 = vmatprep.subr.bf16.mxu0 0
    %513 = vmatpush2.bf16.msra.mxu0 0
    %514 = vmatprep.subr.bf16.mxu0 0
    %515 = vmatpush2.bf16.msra.mxu0 0
    %516 = vmatprep.subr.bf16.mxu0 0
    %517 = vmatpush2.bf16.msra.mxu0 0
    %518 = vmatprep.mubr.bf16.mxu0 0
    %519 = vmatmul.mubr.bf16.gmra.mxu0 %v484
    %v520 = vpop.f32.mrf.mxu0
    %v521 = vadd.f32 0.0, %v520
    %v522 = vpop.f32.mrf.mxu0
    %v523 = vpop.f32.mrf.mxu0
    %v524 = vadd.f32 0.0, %v523
    %v525 = vpop.f32.mrf.mxu0
    %526 = vdwg.mxu0
    %v535 = vunpack.c.l.b16 %v441
    %v536 = vunpack.c.l.b16 %v442
    %v537 = vunpack.c.l.b16 %v443
    %v538 = vunpack.c.l.b16 %v444
    %v539 = vunpack.c.l.b16 %v445
    %v540 = vunpack.c.l.b16 %v446
    %v541 = vunpack.c.l.b16 %v447
    %v542 = vunpack.c.l.b16 %v448
    %v543 = vpack.c.b16 %v536, %v535
    %v544 = vpack.c.b16 %v538, %v537
    %v545 = vpack.c.b16 %v540, %v539
    %v546 = vpack.c.b16 %v542, %v541
    %v552 = vsel %vm482, %v432, 0
    %554 = vmatprep.subr.bf16.mxu0 0
    %555 = vmatpush1.bf16.msra.mxu0 0
    %556 = vmatprep.subr.bf16.mxu0 0
    %557 = vmatpush1.bf16.msra.mxu0 0
    %558 = vmatprep.subr.bf16.mxu0 0
    %559 = vmatpush1.bf16.msra.mxu0 0
    %560 = vmatprep.subr.bf16.mxu0 0
    %561 = vmatpush1.bf16.msra.mxu0 0
    %562 = vmatprep.subr.bf16.mxu0 0
    %563 = vmatpush1.bf16.msra.mxu0 %v546
    %564 = vmatprep.subr.bf16.mxu0 0
    %565 = vmatpush1.bf16.msra.mxu0 %v545
    %566 = vmatprep.subr.bf16.mxu0 0
    %567 = vmatpush1.bf16.msra.mxu0 %v544
    %568 = vmatprep.subr.bf16.mxu0 0
    %569 = vmatpush1.bf16.msra.mxu0 %v543
    %570 = vmatprep.subr.bf16.mxu0 0
    %571 = vmatpush2.bf16.msra.mxu0 0
    %572 = vmatprep.subr.bf16.mxu0 0
    %573 = vmatpush2.bf16.msra.mxu0 0
    %574 = vmatprep.subr.bf16.mxu0 0
    %575 = vmatpush2.bf16.msra.mxu0 0
    %576 = vmatprep.subr.bf16.mxu0 0
    %577 = vmatpush2.bf16.msra.mxu0 0
    %578 = vmatprep.subr.bf16.mxu0 0
    %579 = vmatpush2.bf16.msra.mxu0 0
    %580 = vmatprep.subr.bf16.mxu0 0
    %581 = vmatpush2.bf16.msra.mxu0 0
    %582 = vmatprep.subr.bf16.mxu0 0
    %583 = vmatpush2.bf16.msra.mxu0 0
    %584 = vmatprep.subr.bf16.mxu0 0
    %585 = vmatpush2.bf16.msra.mxu0 0
    %586 = vmatprep.mubr.bf16.mxu0 0
    %587 = vmatmul.mubr.bf16.gmra.mxu0 %v552
    %v588 = vpop.f32.mrf.mxu0
    %v589 = vadd.f32 %v521, %v588
    %v590 = vpop.f32.mrf.mxu0
    %v591 = vpop.f32.mrf.mxu0
    %v592 = vadd.f32 %v524, %v591
    %v593 = vpop.f32.mrf.mxu0
    %594 = vdwg.mxu0
    %s595 = scalar_lea.vmem [#allocation7], 64
    %v596 = vld [vmem:[%s595] sm:$0xf]
    %v597 = vld [vmem:[%s595 + $0x4] sm:$0xf]
    %v598 = vld [vmem:[%s595 + $0x8] sm:$0xf]
    %v599 = vld [vmem:[%s595 + $0xc] sm:$0xf]
    %v600 = vld [vmem:[%s595 + $0x10] sm:$0xf]
    %v601 = vld [vmem:[%s595 + $0x14] sm:$0xf]
    %v602 = vld [vmem:[%s595 + $0x18] sm:$0xf]
    %v603 = vld [vmem:[%s595 + $0x1c] sm:$0xf]
    %v612 = vunpack.c.l.b16 %v596
    %v613 = vunpack.c.l.b16 %v597
    %v614 = vunpack.c.l.b16 %v598
    %v615 = vunpack.c.l.b16 %v599
    %v616 = vunpack.c.l.b16 %v600
    %v617 = vunpack.c.l.b16 %v601
    %v618 = vunpack.c.l.b16 %v602
    %v619 = vunpack.c.l.b16 %v603
    %v620 = vpack.c.b16 %v613, %v612
    %v621 = vpack.c.b16 %v615, %v614
    %v622 = vpack.c.b16 %v617, %v616
    %v623 = vpack.c.b16 %v619, %v618
    %v629 = vsel %vm482, %v439, 0
    %631 = vmatprep.subr.bf16.mxu0 0
    %632 = vmatpush1.bf16.msra.mxu0 0
    %633 = vmatprep.subr.bf16.mxu0 0
    %634 = vmatpush1.bf16.msra.mxu0 0
    %635 = vmatprep.subr.bf16.mxu0 0
    %636 = vmatpush1.bf16.msra.mxu0 0
    %637 = vmatprep.subr.bf16.mxu0 0
    %638 = vmatpush1.bf16.msra.mxu0 0
    %639 = vmatprep.subr.bf16.mxu0 0
    %640 = vmatpush1.bf16.msra.mxu0 %v623
    %641 = vmatprep.subr.bf16.mxu0 0
    %642 = vmatpush1.bf16.msra.mxu0 %v622
    %643 = vmatprep.subr.bf16.mxu0 0
    %644 = vmatpush1.bf16.msra.mxu0 %v621
    %645 = vmatprep.subr.bf16.mxu0 0
    %646 = vmatpush1.bf16.msra.mxu0 %v620
    %647 = vmatprep.subr.bf16.mxu0 0
    %648 = vmatpush2.bf16.msra.mxu0 0
    %649 = vmatprep.subr.bf16.mxu0 0
    %650 = vmatpush2.bf16.msra.mxu0 0
    %651 = vmatprep.subr.bf16.mxu0 0
    %652 = vmatpush2.bf16.msra.mxu0 0
    %653 = vmatprep.subr.bf16.mxu0 0
    %654 = vmatpush2.bf16.msra.mxu0 0
    %655 = vmatprep.subr.bf16.mxu0 0
    %656 = vmatpush2.bf16.msra.mxu0 0
    %657 = vmatprep.subr.bf16.mxu0 0
    %658 = vmatpush2.bf16.msra.mxu0 0
    %659 = vmatprep.subr.bf16.mxu0 0
    %660 = vmatpush2.bf16.msra.mxu0 0
    %661 = vmatprep.subr.bf16.mxu0 0
    %662 = vmatpush2.bf16.msra.mxu0 0
    %663 = vmatprep.mubr.bf16.mxu0 0
    %664 = vmatmul.mubr.bf16.gmra.mxu0 %v629
    %v665 = vpop.f32.mrf.mxu0
    %v666 = vadd.f32 0.0, %v665
    %v667 = vpop.f32.mrf.mxu0
    %v668 = vpop.f32.mrf.mxu0
    %v669 = vadd.f32 0.0, %v668
    %v670 = vpop.f32.mrf.mxu0
    %671 = vdwg.mxu0
    %v672 = vadd.f32 %v589, %v666
    %v673 = vadd.f32 %v592, %v669
    %v674 = vld [vmem:[#allocation8] sm:$0x1]
    %v676 = vlaneseq
    %v677 = vshrl.u32 %v676, 7
    %v678 = vsub.s32 0, %v677
    %v679 = vrot.slane %v674, %v678
    %v681 = vadd.f32 %v672, %v679
    %v682 = vadd.f32 %v673, %v679
    %v683 = vmax.f32 %v681, 0.0
    %v684 = vmax.f32 %v682, 0.0
    %v685 = vrot.slane %v683, 7
    %v686 = vrot.slane %v684, 7
    %v687 = vsel %vm215, %v685, %v686
    %v688 = vsel %vm215, %v686, %v685
    %v689 = vmul.f32 %v688, %v205
    %v690 = vmul.f32 %v687, %v206
    %v691 = vpack.c.bf16 %v690, %v689
    %v692 = vrot.slane %v683, 1
    %v693 = vrot.slane %v684, 1
    %v694 = vsel %vm223, %v692, %v693
    %v695 = vsel %vm223, %v693, %v692
    %v696 = vmul.f32 %v694, %v211
    %v697 = vmul.f32 %v695, %v212
    %v698 = vpack.c.bf16 %v697, %v696
    %v699 = vpack.c.bf16 %v684, %v683
    %v700 = vld [vmem:[#allocation10] sm:$0xf]
    %v701 = vld [vmem:[#allocation10 + $0x4] sm:$0xf]
    %v702 = vld [vmem:[#allocation10 + $0x8] sm:$0xf]
    %v703 = vld [vmem:[#allocation10 + $0xc] sm:$0xf]
    %v704 = vld [vmem:[#allocation10 + $0x10] sm:$0xf]
    %v705 = vld [vmem:[#allocation10 + $0x14] sm:$0xf]
    %v706 = vld [vmem:[#allocation10 + $0x18] sm:$0xf]
    %v707 = vld [vmem:[#allocation10 + $0x1c] sm:$0xf]
    %v708 = vld [vmem:[#allocation10 + $0x20] sm:$0xf]
    %v709 = vld [vmem:[#allocation10 + $0x24] sm:$0xf]
    %v710 = vld [vmem:[#allocation10 + $0x28] sm:$0xf]
    %v711 = vld [vmem:[#allocation10 + $0x2c] sm:$0xf]
    %v712 = vld [vmem:[#allocation10 + $0x30] sm:$0xf]
    %v713 = vld [vmem:[#allocation10 + $0x34] sm:$0xf]
    %v714 = vld [vmem:[#allocation10 + $0x38] sm:$0xf]
    %v715 = vld [vmem:[#allocation10 + $0x3c] sm:$0xf]
    %s716 = scalar_lea.vmem [#allocation10], 64
    %v717 = vld [vmem:[%s716] sm:$0xf]
    %v718 = vld [vmem:[%s716 + $0x4] sm:$0xf]
    %v719 = vld [vmem:[%s716 + $0x8] sm:$0xf]
    %v720 = vld [vmem:[%s716 + $0xc] sm:$0xf]
    %v721 = vld [vmem:[%s716 + $0x10] sm:$0xf]
    %v722 = vld [vmem:[%s716 + $0x14] sm:$0xf]
    %v723 = vld [vmem:[%s716 + $0x18] sm:$0xf]
    %v724 = vld [vmem:[%s716 + $0x1c] sm:$0xf]
    %v725 = vld [vmem:[%s716 + $0x20] sm:$0xf]
    %v726 = vld [vmem:[%s716 + $0x24] sm:$0xf]
    %v727 = vld [vmem:[%s716 + $0x28] sm:$0xf]
    %v728 = vld [vmem:[%s716 + $0x2c] sm:$0xf]
    %v729 = vld [vmem:[%s716 + $0x30] sm:$0xf]
    %v730 = vld [vmem:[%s716 + $0x34] sm:$0xf]
    %v731 = vld [vmem:[%s716 + $0x38] sm:$0xf]
    %v732 = vld [vmem:[%s716 + $0x3c] sm:$0xf]
    %v749 = vunpack.c.l.b16 %v717
    %v750 = vunpack.c.l.b16 %v718
    %v751 = vunpack.c.l.b16 %v719
    %v752 = vunpack.c.l.b16 %v720
    %v753 = vunpack.c.l.b16 %v721
    %v754 = vunpack.c.l.b16 %v722
    %v755 = vunpack.c.l.b16 %v723
    %v756 = vunpack.c.l.b16 %v724
    %v757 = vunpack.c.l.b16 %v725
    %v758 = vunpack.c.l.b16 %v726
    %v759 = vunpack.c.l.b16 %v727
    %v760 = vunpack.c.l.b16 %v728
    %v761 = vunpack.c.l.b16 %v729
    %v762 = vunpack.c.l.b16 %v730
    %v763 = vunpack.c.l.b16 %v731
    %v764 = vunpack.c.l.b16 %v732
    %v765 = vpack.c.b16 %v750, %v749
    %v766 = vpack.c.b16 %v752, %v751
    %v767 = vpack.c.b16 %v754, %v753
    %v768 = vpack.c.b16 %v756, %v755
    %v769 = vpack.c.b16 %v758, %v757
    %v770 = vpack.c.b16 %v760, %v759
    %v771 = vpack.c.b16 %v762, %v761
    %v772 = vpack.c.b16 %v764, %v763
    %781 = vmatprep.subr.bf16.mxu0 0
    %782 = vmatpush1.bf16.msra.mxu0 %v772
    %783 = vmatprep.subr.bf16.mxu0 0
    %784 = vmatpush1.bf16.msra.mxu0 %v771
    %785 = vmatprep.subr.bf16.mxu0 0
    %786 = vmatpush1.bf16.msra.mxu0 %v770
    %787 = vmatprep.subr.bf16.mxu0 0
    %788 = vmatpush1.bf16.msra.mxu0 %v769
    %789 = vmatprep.subr.bf16.mxu0 0
    %790 = vmatpush1.bf16.msra.mxu0 %v768
    %791 = vmatprep.subr.bf16.mxu0 0
    %792 = vmatpush1.bf16.msra.mxu0 %v767
    %793 = vmatprep.subr.bf16.mxu0 0
    %794 = vmatpush1.bf16.msra.mxu0 %v766
    %795 = vmatprep.subr.bf16.mxu0 0
    %796 = vmatpush1.bf16.msra.mxu0 %v765
    %797 = vmatprep.subr.bf16.mxu0 0
    %798 = vmatpush2.bf16.msra.mxu0 0
    %799 = vmatprep.subr.bf16.mxu0 0
    %800 = vmatpush2.bf16.msra.mxu0 0
    %801 = vmatprep.subr.bf16.mxu0 0
    %802 = vmatpush2.bf16.msra.mxu0 0
    %803 = vmatprep.subr.bf16.mxu0 0
    %804 = vmatpush2.bf16.msra.mxu0 0
    %805 = vmatprep.subr.bf16.mxu0 0
    %806 = vmatpush2.bf16.msra.mxu0 0
    %807 = vmatprep.subr.bf16.mxu0 0
    %808 = vmatpush2.bf16.msra.mxu0 0
    %809 = vmatprep.subr.bf16.mxu0 0
    %810 = vmatpush2.bf16.msra.mxu0 0
    %811 = vmatprep.subr.bf16.mxu0 0
    %812 = vmatpush2.bf16.msra.mxu0 0
    %813 = vmatprep.mubr.bf16.mxu0 0
    %814 = vmatmul.mubr.bf16.gmra.mxu0 %v699
    %v815 = vpop.f32.mrf.mxu0
    %v816 = vadd.f32 0.0, %v815
    %v817 = vpop.f32.mrf.mxu0
    %v818 = vpop.f32.mrf.mxu0
    %v819 = vadd.f32 0.0, %v818
    %v820 = vpop.f32.mrf.mxu0
    %821 = vdwg.mxu0
    %v838 = vunpack.c.l.b16 %v700
    %v839 = vunpack.c.l.b16 %v701
    %v840 = vunpack.c.l.b16 %v702
    %v841 = vunpack.c.l.b16 %v703
    %v842 = vunpack.c.l.b16 %v704
    %v843 = vunpack.c.l.b16 %v705
    %v844 = vunpack.c.l.b16 %v706
    %v845 = vunpack.c.l.b16 %v707
    %v846 = vunpack.c.l.b16 %v708
    %v847 = vunpack.c.l.b16 %v709
    %v848 = vunpack.c.l.b16 %v710
    %v849 = vunpack.c.l.b16 %v711
    %v850 = vunpack.c.l.b16 %v712
    %v851 = vunpack.c.l.b16 %v713
    %v852 = vunpack.c.l.b16 %v714
    %v853 = vunpack.c.l.b16 %v715
    %v854 = vpack.c.b16 %v839, %v838
    %v855 = vpack.c.b16 %v841, %v840
    %v856 = vpack.c.b16 %v843, %v842
    %v857 = vpack.c.b16 %v845, %v844
    %v858 = vpack.c.b16 %v847, %v846
    %v859 = vpack.c.b16 %v849, %v848
    %v860 = vpack.c.b16 %v851, %v850
    %v861 = vpack.c.b16 %v853, %v852
    %870 = vmatprep.subr.bf16.mxu0 0
    %871 = vmatpush1.bf16.msra.mxu0 %v861
    %872 = vmatprep.subr.bf16.mxu0 0
    %873 = vmatpush1.bf16.msra.mxu0 %v860
    %874 = vmatprep.subr.bf16.mxu0 0
    %875 = vmatpush1.bf16.msra.mxu0 %v859
    %876 = vmatprep.subr.bf16.mxu0 0
    %877 = vmatpush1.bf16.msra.mxu0 %v858
    %878 = vmatprep.subr.bf16.mxu0 0
    %879 = vmatpush1.bf16.msra.mxu0 %v857
    %880 = vmatprep.subr.bf16.mxu0 0
    %881 = vmatpush1.bf16.msra.mxu0 %v856
    %882 = vmatprep.subr.bf16.mxu0 0
    %883 = vmatpush1.bf16.msra.mxu0 %v855
    %884 = vmatprep.subr.bf16.mxu0 0
    %885 = vmatpush1.bf16.msra.mxu0 %v854
    %886 = vmatprep.subr.bf16.mxu0 0
    %887 = vmatpush2.bf16.msra.mxu0 0
    %888 = vmatprep.subr.bf16.mxu0 0
    %889 = vmatpush2.bf16.msra.mxu0 0
    %890 = vmatprep.subr.bf16.mxu0 0
    %891 = vmatpush2.bf16.msra.mxu0 0
    %892 = vmatprep.subr.bf16.mxu0 0
    %893 = vmatpush2.bf16.msra.mxu0 0
    %894 = vmatprep.subr.bf16.mxu0 0
    %895 = vmatpush2.bf16.msra.mxu0 0
    %896 = vmatprep.subr.bf16.mxu0 0
    %897 = vmatpush2.bf16.msra.mxu0 0
    %898 = vmatprep.subr.bf16.mxu0 0
    %899 = vmatpush2.bf16.msra.mxu0 0
    %900 = vmatprep.subr.bf16.mxu0 0
    %901 = vmatpush2.bf16.msra.mxu0 0
    %902 = vmatprep.mubr.bf16.mxu0 0
    %903 = vmatmul.mubr.bf16.gmra.mxu0 %v691
    %v904 = vpop.f32.mrf.mxu0
    %v905 = vadd.f32 %v816, %v904
    %v906 = vpop.f32.mrf.mxu0
    %v907 = vpop.f32.mrf.mxu0
    %v908 = vadd.f32 %v819, %v907
    %v909 = vpop.f32.mrf.mxu0
    %910 = vdwg.mxu0
    %s911 = scalar_lea.vmem [#allocation10], 128
    %v912 = vld [vmem:[%s911] sm:$0xf]
    %v913 = vld [vmem:[%s911 + $0x4] sm:$0xf]
    %v914 = vld [vmem:[%s911 + $0x8] sm:$0xf]
    %v915 = vld [vmem:[%s911 + $0xc] sm:$0xf]
    %v916 = vld [vmem:[%s911 + $0x10] sm:$0xf]
    %v917 = vld [vmem:[%s911 + $0x14] sm:$0xf]
    %v918 = vld [vmem:[%s911 + $0x18] sm:$0xf]
    %v919 = vld [vmem:[%s911 + $0x1c] sm:$0xf]
    %v920 = vld [vmem:[%s911 + $0x20] sm:$0xf]
    %v921 = vld [vmem:[%s911 + $0x24] sm:$0xf]
    %v922 = vld [vmem:[%s911 + $0x28] sm:$0xf]
    %v923 = vld [vmem:[%s911 + $0x2c] sm:$0xf]
    %v924 = vld [vmem:[%s911 + $0x30] sm:$0xf]
    %v925 = vld [vmem:[%s911 + $0x34] sm:$0xf]
    %v926 = vld [vmem:[%s911 + $0x38] sm:$0xf]
    %v927 = vld [vmem:[%s911 + $0x3c] sm:$0xf]
    %v944 = vunpack.c.l.b16 %v912
    %v945 = vunpack.c.l.b16 %v913
    %v946 = vunpack.c.l.b16 %v914
    %v947 = vunpack.c.l.b16 %v915
    %v948 = vunpack.c.l.b16 %v916
    %v949 = vunpack.c.l.b16 %v917
    %v950 = vunpack.c.l.b16 %v918
    %v951 = vunpack.c.l.b16 %v919
    %v952 = vunpack.c.l.b16 %v920
    %v953 = vunpack.c.l.b16 %v921
    %v954 = vunpack.c.l.b16 %v922
    %v955 = vunpack.c.l.b16 %v923
    %v956 = vunpack.c.l.b16 %v924
    %v957 = vunpack.c.l.b16 %v925
    %v958 = vunpack.c.l.b16 %v926
    %v959 = vunpack.c.l.b16 %v927
    %v960 = vpack.c.b16 %v945, %v944
    %v961 = vpack.c.b16 %v947, %v946
    %v962 = vpack.c.b16 %v949, %v948
    %v963 = vpack.c.b16 %v951, %v950
    %v964 = vpack.c.b16 %v953, %v952
    %v965 = vpack.c.b16 %v955, %v954
    %v966 = vpack.c.b16 %v957, %v956
    %v967 = vpack.c.b16 %v959, %v958
    %976 = vmatprep.subr.bf16.mxu0 0
    %977 = vmatpush1.bf16.msra.mxu0 %v967
    %978 = vmatprep.subr.bf16.mxu0 0
    %979 = vmatpush1.bf16.msra.mxu0 %v966
    %980 = vmatprep.subr.bf16.mxu0 0
    %981 = vmatpush1.bf16.msra.mxu0 %v965
    %982 = vmatprep.subr.bf16.mxu0 0
    %983 = vmatpush1.bf16.msra.mxu0 %v964
    %984 = vmatprep.subr.bf16.mxu0 0
    %985 = vmatpush1.bf16.msra.mxu0 %v963
    %986 = vmatprep.subr.bf16.mxu0 0
    %987 = vmatpush1.bf16.msra.mxu0 %v962
    %988 = vmatprep.subr.bf16.mxu0 0
    %989 = vmatpush1.bf16.msra.mxu0 %v961
    %990 = vmatprep.subr.bf16.mxu0 0
    %991 = vmatpush1.bf16.msra.mxu0 %v960
    %992 = vmatprep.subr.bf16.mxu0 0
    %993 = vmatpush2.bf16.msra.mxu0 0
    %994 = vmatprep.subr.bf16.mxu0 0
    %995 = vmatpush2.bf16.msra.mxu0 0
    %996 = vmatprep.subr.bf16.mxu0 0
    %997 = vmatpush2.bf16.msra.mxu0 0
    %998 = vmatprep.subr.bf16.mxu0 0
    %999 = vmatpush2.bf16.msra.mxu0 0
    %1000 = vmatprep.subr.bf16.mxu0 0
    %1001 = vmatpush2.bf16.msra.mxu0 0
    %1002 = vmatprep.subr.bf16.mxu0 0
    %1003 = vmatpush2.bf16.msra.mxu0 0
    %1004 = vmatprep.subr.bf16.mxu0 0
    %1005 = vmatpush2.bf16.msra.mxu0 0
    %1006 = vmatprep.subr.bf16.mxu0 0
    %1007 = vmatpush2.bf16.msra.mxu0 0
    %1008 = vmatprep.mubr.bf16.mxu0 0
    %1009 = vmatmul.mubr.bf16.gmra.mxu0 %v698
    %v1010 = vpop.f32.mrf.mxu0
    %v1011 = vadd.f32 0.0, %v1010
    %v1012 = vpop.f32.mrf.mxu0
    %v1013 = vpop.f32.mrf.mxu0
    %v1014 = vadd.f32 0.0, %v1013
    %v1015 = vpop.f32.mrf.mxu0
    %1016 = vdwg.mxu0
    %v1017 = vadd.f32 %v905, %v1011
    %v1018 = vadd.f32 %v908, %v1014
    %v1019 = vld [vmem:[%s6] sm:$0x1]
    %v1021 = vlaneseq
    %v1022 = vshrl.u32 %v1021, 7
    %v1023 = vsub.s32 0, %v1022
    %v1024 = vrot.slane %v1019, %v1023
    %v1026 = vadd.f32 %v1017, %v1024
    %v1027 = vadd.f32 %v1018, %v1024
    %v1028 = vmax.f32 %v1026, 0.0
    %v1029 = vmax.f32 %v1027, 0.0
    %v1030 = vrot.slane %v1028, 7
    %v1031 = vrot.slane %v1029, 7
    %v1032 = vsel %vm215, %v1030, %v1031
    %v1033 = vsel %vm215, %v1031, %v1030
    %v1034 = vmul.f32 %v1033, %v205
    %v1035 = vmul.f32 %v1032, %v206
    %v1036 = vpack.c.bf16 %v1035, %v1034
    %v1037 = vrot.slane %v1028, 1
    %v1038 = vrot.slane %v1029, 1
    %v1039 = vsel %vm223, %v1037, %v1038
    %v1040 = vsel %vm223, %v1038, %v1037
    %v1041 = vmul.f32 %v1039, %v211
    %v1042 = vmul.f32 %v1040, %v212
    %v1043 = vpack.c.bf16 %v1042, %v1041
    %v1044 = vpack.c.bf16 %v1029, %v1028
    %v1045 = vld [vmem:[#allocation11] sm:$0xff]
    %v1046 = vld [vmem:[#allocation11 + $0x8] sm:$0xff]
    %v1047 = vld [vmem:[#allocation11 + $0x10] sm:$0xff]
    %v1048 = vld [vmem:[#allocation11 + $0x18] sm:$0xff]
    %v1049 = vld [vmem:[#allocation11 + $0x20] sm:$0xff]
    %v1050 = vld [vmem:[#allocation11 + $0x28] sm:$0xff]
    %v1051 = vld [vmem:[#allocation11 + $0x30] sm:$0xff]
    %v1052 = vld [vmem:[#allocation11 + $0x38] sm:$0xff]
    %v1053 = vld [vmem:[#allocation11 + $0x40] sm:$0xff]
    %v1054 = vld [vmem:[#allocation11 + $0x48] sm:$0xff]
    %v1055 = vld [vmem:[#allocation11 + $0x50] sm:$0xff]
    %v1056 = vld [vmem:[#allocation11 + $0x58] sm:$0xff]
    %v1057 = vld [vmem:[#allocation11 + $0x60] sm:$0xff]
    %v1058 = vld [vmem:[#allocation11 + $0x68] sm:$0xff]
    %v1059 = vld [vmem:[#allocation11 + $0x70] sm:$0xff]
    %v1060 = vld [vmem:[#allocation11 + $0x78] sm:$0xff]
    %s1061 = scalar_lea.vmem [#allocation11], 128
    %v1062 = vld [vmem:[%s1061] sm:$0xff]
    %v1063 = vld [vmem:[%s1061 + $0x8] sm:$0xff]
    %v1064 = vld [vmem:[%s1061 + $0x10] sm:$0xff]
    %v1065 = vld [vmem:[%s1061 + $0x18] sm:$0xff]
    %v1066 = vld [vmem:[%s1061 + $0x20] sm:$0xff]
    %v1067 = vld [vmem:[%s1061 + $0x28] sm:$0xff]
    %v1068 = vld [vmem:[%s1061 + $0x30] sm:$0xff]
    %v1069 = vld [vmem:[%s1061 + $0x38] sm:$0xff]
    %v1070 = vld [vmem:[%s1061 + $0x40] sm:$0xff]
    %v1071 = vld [vmem:[%s1061 + $0x48] sm:$0xff]
    %v1072 = vld [vmem:[%s1061 + $0x50] sm:$0xff]
    %v1073 = vld [vmem:[%s1061 + $0x58] sm:$0xff]
    %v1074 = vld [vmem:[%s1061 + $0x60] sm:$0xff]
    %v1075 = vld [vmem:[%s1061 + $0x68] sm:$0xff]
    %v1076 = vld [vmem:[%s1061 + $0x70] sm:$0xff]
    %v1077 = vld [vmem:[%s1061 + $0x78] sm:$0xff]
    %v1094 = vunpack.c.l.b16 %v1062
    %v1095 = vunpack.c.h.b16 %v1062
    %v1096 = vunpack.c.l.b16 %v1063
    %v1097 = vunpack.c.h.b16 %v1063
    %v1098 = vunpack.c.l.b16 %v1064
    %v1099 = vunpack.c.h.b16 %v1064
    %v1100 = vunpack.c.l.b16 %v1065
    %v1101 = vunpack.c.h.b16 %v1065
    %v1102 = vunpack.c.l.b16 %v1066
    %v1103 = vunpack.c.h.b16 %v1066
    %v1104 = vunpack.c.l.b16 %v1067
    %v1105 = vunpack.c.h.b16 %v1067
    %v1106 = vunpack.c.l.b16 %v1068
    %v1107 = vunpack.c.h.b16 %v1068
    %v1108 = vunpack.c.l.b16 %v1069
    %v1109 = vunpack.c.h.b16 %v1069
    %v1110 = vunpack.c.l.b16 %v1070
    %v1111 = vunpack.c.h.b16 %v1070
    %v1112 = vunpack.c.l.b16 %v1071
    %v1113 = vunpack.c.h.b16 %v1071
    %v1114 = vunpack.c.l.b16 %v1072
    %v1115 = vunpack.c.h.b16 %v1072
    %v1116 = vunpack.c.l.b16 %v1073
    %v1117 = vunpack.c.h.b16 %v1073
    %v1118 = vunpack.c.l.b16 %v1074
    %v1119 = vunpack.c.h.b16 %v1074
    %v1120 = vunpack.c.l.b16 %v1075
    %v1121 = vunpack.c.h.b16 %v1075
    %v1122 = vunpack.c.l.b16 %v1076
    %v1123 = vunpack.c.h.b16 %v1076
    %v1124 = vunpack.c.l.b16 %v1077
    %v1125 = vunpack.c.h.b16 %v1077
    %v1126 = vpack.c.b16 %v1096, %v1094
    %v1127 = vpack.c.b16 %v1097, %v1095
    %v1128 = vpack.c.b16 %v1100, %v1098
    %v1129 = vpack.c.b16 %v1101, %v1099
    %v1130 = vpack.c.b16 %v1104, %v1102
    %v1131 = vpack.c.b16 %v1105, %v1103
    %v1132 = vpack.c.b16 %v1108, %v1106
    %v1133 = vpack.c.b16 %v1109, %v1107
    %v1134 = vpack.c.b16 %v1112, %v1110
    %v1135 = vpack.c.b16 %v1113, %v1111
    %v1136 = vpack.c.b16 %v1116, %v1114
    %v1137 = vpack.c.b16 %v1117, %v1115
    %v1138 = vpack.c.b16 %v1120, %v1118
    %v1139 = vpack.c.b16 %v1121, %v1119
    %v1140 = vpack.c.b16 %v1124, %v1122
    %v1141 = vpack.c.b16 %v1125, %v1123
    %1158 = vmatprep.subr.bf16.mxu0 %v1141
    %1159 = vmatpush1.bf16.msra.mxu0 %v1140
    %1160 = vmatprep.subr.bf16.mxu0 %v1139
    %1161 = vmatpush1.bf16.msra.mxu0 %v1138
    %1162 = vmatprep.subr.bf16.mxu0 %v1137
    %1163 = vmatpush1.bf16.msra.mxu0 %v1136
    %1164 = vmatprep.subr.bf16.mxu0 %v1135
    %1165 = vmatpush1.bf16.msra.mxu0 %v1134
    %1166 = vmatprep.subr.bf16.mxu0 %v1133
    %1167 = vmatpush1.bf16.msra.mxu0 %v1132
    %1168 = vmatprep.subr.bf16.mxu0 %v1131
    %1169 = vmatpush1.bf16.msra.mxu0 %v1130
    %1170 = vmatprep.subr.bf16.mxu0 %v1129
    %1171 = vmatpush1.bf16.msra.mxu0 %v1128
    %1172 = vmatprep.subr.bf16.mxu0 %v1127
    %1173 = vmatpush1.bf16.msra.mxu0 %v1126
    %1174 = vmatprep.subr.bf16.mxu0 0
    %1175 = vmatpush2.bf16.msra.mxu0 0
    %1176 = vmatprep.subr.bf16.mxu0 0
    %1177 = vmatpush2.bf16.msra.mxu0 0
    %1178 = vmatprep.subr.bf16.mxu0 0
    %1179 = vmatpush2.bf16.msra.mxu0 0
    %1180 = vmatprep.subr.bf16.mxu0 0
    %1181 = vmatpush2.bf16.msra.mxu0 0
    %1182 = vmatprep.subr.bf16.mxu0 0
    %1183 = vmatpush2.bf16.msra.mxu0 0
    %1184 = vmatprep.subr.bf16.mxu0 0
    %1185 = vmatpush2.bf16.msra.mxu0 0
    %1186 = vmatprep.subr.bf16.mxu0 0
    %1187 = vmatpush2.bf16.msra.mxu0 0
    %1188 = vmatprep.subr.bf16.mxu0 0
    %1189 = vmatpush2.bf16.msra.mxu0 0
    %1190 = vmatprep.mubr.bf16.mxu0 0
    %1191 = vmatmul.mubr.bf16.gmra.mxu0 %v1044
    %v1192 = vpop.f32.mrf.mxu0
    %v1193 = vadd.f32 0.0, %v1192
    %v1194 = vpop.f32.mrf.mxu0
    %v1195 = vadd.f32 0.0, %v1194
    %v1196 = vpop.f32.mrf.mxu0
    %v1197 = vadd.f32 0.0, %v1196
    %v1198 = vpop.f32.mrf.mxu0
    %v1199 = vadd.f32 0.0, %v1198
    %1200 = vdwg.mxu0
    %v1217 = vunpack.c.l.b16 %v1045
    %v1218 = vunpack.c.h.b16 %v1045
    %v1219 = vunpack.c.l.b16 %v1046
    %v1220 = vunpack.c.h.b16 %v1046
    %v1221 = vunpack.c.l.b16 %v1047
    %v1222 = vunpack.c.h.b16 %v1047
    %v1223 = vunpack.c.l.b16 %v1048
    %v1224 = vunpack.c.h.b16 %v1048
    %v1225 = vunpack.c.l.b16 %v1049
    %v1226 = vunpack.c.h.b16 %v1049
    %v1227 = vunpack.c.l.b16 %v1050
    %v1228 = vunpack.c.h.b16 %v1050
    %v1229 = vunpack.c.l.b16 %v1051
    %v1230 = vunpack.c.h.b16 %v1051
    %v1231 = vunpack.c.l.b16 %v1052
    %v1232 = vunpack.c.h.b16 %v1052
    %v1233 = vunpack.c.l.b16 %v1053
    %v1234 = vunpack.c.h.b16 %v1053
    %v1235 = vunpack.c.l.b16 %v1054
    %v1236 = vunpack.c.h.b16 %v1054
    %v1237 = vunpack.c.l.b16 %v1055
    %v1238 = vunpack.c.h.b16 %v1055
    %v1239 = vunpack.c.l.b16 %v1056
    %v1240 = vunpack.c.h.b16 %v1056
    %v1241 = vunpack.c.l.b16 %v1057
    %v1242 = vunpack.c.h.b16 %v1057
    %v1243 = vunpack.c.l.b16 %v1058
    %v1244 = vunpack.c.h.b16 %v1058
    %v1245 = vunpack.c.l.b16 %v1059
    %v1246 = vunpack.c.h.b16 %v1059
    %v1247 = vunpack.c.l.b16 %v1060
    %v1248 = vunpack.c.h.b16 %v1060
    %v1249 = vpack.c.b16 %v1219, %v1217
    %v1250 = vpack.c.b16 %v1220, %v1218
    %v1251 = vpack.c.b16 %v1223, %v1221
    %v1252 = vpack.c.b16 %v1224, %v1222
    %v1253 = vpack.c.b16 %v1227, %v1225
    %v1254 = vpack.c.b16 %v1228, %v1226
    %v1255 = vpack.c.b16 %v1231, %v1229
    %v1256 = vpack.c.b16 %v1232, %v1230
    %v1257 = vpack.c.b16 %v1235, %v1233
    %v1258 = vpack.c.b16 %v1236, %v1234
    %v1259 = vpack.c.b16 %v1239, %v1237
    %v1260 = vpack.c.b16 %v1240, %v1238
    %v1261 = vpack.c.b16 %v1243, %v1241
    %v1262 = vpack.c.b16 %v1244, %v1242
    %v1263 = vpack.c.b16 %v1247, %v1245
    %v1264 = vpack.c.b16 %v1248, %v1246
    %1281 = vmatprep.subr.bf16.mxu0 %v1264
    %1282 = vmatpush1.bf16.msra.mxu0 %v1263
    %1283 = vmatprep.subr.bf16.mxu0 %v1262
    %1284 = vmatpush1.bf16.msra.mxu0 %v1261
    %1285 = vmatprep.subr.bf16.mxu0 %v1260
    %1286 = vmatpush1.bf16.msra.mxu0 %v1259
    %1287 = vmatprep.subr.bf16.mxu0 %v1258
    %1288 = vmatpush1.bf16.msra.mxu0 %v1257
    %1289 = vmatprep.subr.bf16.mxu0 %v1256
    %1290 = vmatpush1.bf16.msra.mxu0 %v1255
    %1291 = vmatprep.subr.bf16.mxu0 %v1254
    %1292 = vmatpush1.bf16.msra.mxu0 %v1253
    %1293 = vmatprep.subr.bf16.mxu0 %v1252
    %1294 = vmatpush1.bf16.msra.mxu0 %v1251
    %1295 = vmatprep.subr.bf16.mxu0 %v1250
    %1296 = vmatpush1.bf16.msra.mxu0 %v1249
    %1297 = vmatprep.subr.bf16.mxu0 0
    %1298 = vmatpush2.bf16.msra.mxu0 0
    %1299 = vmatprep.subr.bf16.mxu0 0
    %1300 = vmatpush2.bf16.msra.mxu0 0
    %1301 = vmatprep.subr.bf16.mxu0 0
    %1302 = vmatpush2.bf16.msra.mxu0 0
    %1303 = vmatprep.subr.bf16.mxu0 0
    %1304 = vmatpush2.bf16.msra.mxu0 0
    %1305 = vmatprep.subr.bf16.mxu0 0
    %1306 = vmatpush2.bf16.msra.mxu0 0
    %1307 = vmatprep.subr.bf16.mxu0 0
    %1308 = vmatpush2.bf16.msra.mxu0 0
    %1309 = vmatprep.subr.bf16.mxu0 0
    %1310 = vmatpush2.bf16.msra.mxu0 0
    %1311 = vmatprep.subr.bf16.mxu0 0
    %1312 = vmatpush2.bf16.msra.mxu0 0
    %1313 = vmatprep.mubr.bf16.mxu0 0
    %1314 = vmatmul.mubr.bf16.gmra.mxu0 %v1036
    %v1315 = vpop.f32.mrf.mxu0
    %v1316 = vadd.f32 %v1193, %v1315
    %v1317 = vpop.f32.mrf.mxu0
    %v1318 = vadd.f32 %v1195, %v1317
    %v1319 = vpop.f32.mrf.mxu0
    %v1320 = vadd.f32 %v1197, %v1319
    %v1321 = vpop.f32.mrf.mxu0
    %v1322 = vadd.f32 %v1199, %v1321
    %1323 = vdwg.mxu0
    %s1324 = scalar_lea.vmem [#allocation11], 256
    %v1325 = vld [vmem:[%s1324] sm:$0xff]
    %v1326 = vld [vmem:[%s1324 + $0x8] sm:$0xff]
    %v1327 = vld [vmem:[%s1324 + $0x10] sm:$0xff]
    %v1328 = vld [vmem:[%s1324 + $0x18] sm:$0xff]
    %v1329 = vld [vmem:[%s1324 + $0x20] sm:$0xff]
    %v1330 = vld [vmem:[%s1324 + $0x28] sm:$0xff]
    %v1331 = vld [vmem:[%s1324 + $0x30] sm:$0xff]
    %v1332 = vld [vmem:[%s1324 + $0x38] sm:$0xff]
    %v1333 = vld [vmem:[%s1324 + $0x40] sm:$0xff]
    %v1334 = vld [vmem:[%s1324 + $0x48] sm:$0xff]
    %v1335 = vld [vmem:[%s1324 + $0x50] sm:$0xff]
    %v1336 = vld [vmem:[%s1324 + $0x58] sm:$0xff]
    %v1337 = vld [vmem:[%s1324 + $0x60] sm:$0xff]
    %v1338 = vld [vmem:[%s1324 + $0x68] sm:$0xff]
    %v1339 = vld [vmem:[%s1324 + $0x70] sm:$0xff]
    %v1340 = vld [vmem:[%s1324 + $0x78] sm:$0xff]
    %v1357 = vunpack.c.l.b16 %v1325
    %v1358 = vunpack.c.h.b16 %v1325
    %v1359 = vunpack.c.l.b16 %v1326
    %v1360 = vunpack.c.h.b16 %v1326
    %v1361 = vunpack.c.l.b16 %v1327
    %v1362 = vunpack.c.h.b16 %v1327
    %v1363 = vunpack.c.l.b16 %v1328
    %v1364 = vunpack.c.h.b16 %v1328
    %v1365 = vunpack.c.l.b16 %v1329
    %v1366 = vunpack.c.h.b16 %v1329
    %v1367 = vunpack.c.l.b16 %v1330
    %v1368 = vunpack.c.h.b16 %v1330
    %v1369 = vunpack.c.l.b16 %v1331
    %v1370 = vunpack.c.h.b16 %v1331
    %v1371 = vunpack.c.l.b16 %v1332
    %v1372 = vunpack.c.h.b16 %v1332
    %v1373 = vunpack.c.l.b16 %v1333
    %v1374 = vunpack.c.h.b16 %v1333
    %v1375 = vunpack.c.l.b16 %v1334
    %v1376 = vunpack.c.h.b16 %v1334
    %v1377 = vunpack.c.l.b16 %v1335
    %v1378 = vunpack.c.h.b16 %v1335
    %v1379 = vunpack.c.l.b16 %v1336
    %v1380 = vunpack.c.h.b16 %v1336
    %v1381 = vunpack.c.l.b16 %v1337
    %v1382 = vunpack.c.h.b16 %v1337
    %v1383 = vunpack.c.l.b16 %v1338
    %v1384 = vunpack.c.h.b16 %v1338
    %v1385 = vunpack.c.l.b16 %v1339
    %v1386 = vunpack.c.h.b16 %v1339
    %v1387 = vunpack.c.l.b16 %v1340
    %v1388 = vunpack.c.h.b16 %v1340
    %v1389 = vpack.c.b16 %v1359, %v1357
    %v1390 = vpack.c.b16 %v1360, %v1358
    %v1391 = vpack.c.b16 %v1363, %v1361
    %v1392 = vpack.c.b16 %v1364, %v1362
    %v1393 = vpack.c.b16 %v1367, %v1365
    %v1394 = vpack.c.b16 %v1368, %v1366
    %v1395 = vpack.c.b16 %v1371, %v1369
    %v1396 = vpack.c.b16 %v1372, %v1370
    %v1397 = vpack.c.b16 %v1375, %v1373
    %v1398 = vpack.c.b16 %v1376, %v1374
    %v1399 = vpack.c.b16 %v1379, %v1377
    %v1400 = vpack.c.b16 %v1380, %v1378
    %v1401 = vpack.c.b16 %v1383, %v1381
    %v1402 = vpack.c.b16 %v1384, %v1382
    %v1403 = vpack.c.b16 %v1387, %v1385
    %v1404 = vpack.c.b16 %v1388, %v1386
    %1421 = vmatprep.subr.bf16.mxu0 %v1404
    %1422 = vmatpush1.bf16.msra.mxu0 %v1403
    %1423 = vmatprep.subr.bf16.mxu0 %v1402
    %1424 = vmatpush1.bf16.msra.mxu0 %v1401
    %1425 = vmatprep.subr.bf16.mxu0 %v1400
    %1426 = vmatpush1.bf16.msra.mxu0 %v1399
    %1427 = vmatprep.subr.bf16.mxu0 %v1398
    %1428 = vmatpush1.bf16.msra.mxu0 %v1397
    %1429 = vmatprep.subr.bf16.mxu0 %v1396
    %1430 = vmatpush1.bf16.msra.mxu0 %v1395
    %1431 = vmatprep.subr.bf16.mxu0 %v1394
    %1432 = vmatpush1.bf16.msra.mxu0 %v1393
    %1433 = vmatprep.subr.bf16.mxu0 %v1392
    %1434 = vmatpush1.bf16.msra.mxu0 %v1391
    %1435 = vmatprep.subr.bf16.mxu0 %v1390
    %1436 = vmatpush1.bf16.msra.mxu0 %v1389
    %1437 = vmatprep.subr.bf16.mxu0 0
    %1438 = vmatpush2.bf16.msra.mxu0 0
    %1439 = vmatprep.subr.bf16.mxu0 0
    %1440 = vmatpush2.bf16.msra.mxu0 0
    %1441 = vmatprep.subr.bf16.mxu0 0
    %1442 = vmatpush2.bf16.msra.mxu0 0
    %1443 = vmatprep.subr.bf16.mxu0 0
    %1444 = vmatpush2.bf16.msra.mxu0 0
    %1445 = vmatprep.subr.bf16.mxu0 0
    %1446 = vmatpush2.bf16.msra.mxu0 0
    %1447 = vmatprep.subr.bf16.mxu0 0
    %1448 = vmatpush2.bf16.msra.mxu0 0
    %1449 = vmatprep.subr.bf16.mxu0 0
    %1450 = vmatpush2.bf16.msra.mxu0 0
    %1451 = vmatprep.subr.bf16.mxu0 0
    %1452 = vmatpush2.bf16.msra.mxu0 0
    %1453 = vmatprep.mubr.bf16.mxu0 0
    %1454 = vmatmul.mubr.bf16.gmra.mxu0 %v1043
    %v1455 = vpop.f32.mrf.mxu0
    %v1456 = vadd.f32 0.0, %v1455
    %v1457 = vpop.f32.mrf.mxu0
    %v1458 = vadd.f32 0.0, %v1457
    %v1459 = vpop.f32.mrf.mxu0
    %v1460 = vadd.f32 0.0, %v1459
    %v1461 = vpop.f32.mrf.mxu0
    %v1462 = vadd.f32 0.0, %v1461
    %1463 = vdwg.mxu0
    %v1464 = vadd.f32 %v1316, %v1456
    %v1465 = vadd.f32 %v1318, %v1458
    %v1466 = vadd.f32 %v1320, %v1460
    %v1467 = vadd.f32 %v1322, %v1462
    %v1468 = vld [vmem:[%s8] sm:$0x3]
    %v1470 = vlaneseq
    %v1471 = vshrl.u32 %v1470, 7
    %v1472 = vsub.s32 0, %v1471
    %v1473 = vrot.slane %v1468, %v1472
    %v1474 = vlaneseq
    %v1475 = vshrl.u32 %v1474, 7
    %v1476 = vsub.s32 1, %v1475
    %v1477 = vrot.slane %v1468, %v1476
    %v1480 = vadd.f32 %v1464, %v1473
    %v1481 = vadd.f32 %v1465, %v1477
    %v1482 = vadd.f32 %v1466, %v1473
    %v1483 = vadd.f32 %v1467, %v1477
    %v1484 = vmax.f32 %v1480, 0.0
    %v1485 = vmax.f32 %v1481, 0.0
    %v1486 = vmax.f32 %v1482, 0.0
    %v1487 = vmax.f32 %v1483, 0.0
    %v1488 = vrot.slane %v1484, 7
    %v1489 = vrot.slane %v1485, 7
    %v1490 = vrot.slane %v1486, 7
    %v1491 = vrot.slane %v1487, 7
    %v1492 = vsel %vm215, %v1488, %v1490
    %v1493 = vsel %vm215, %v1489, %v1491
    %v1494 = vsel %vm215, %v1490, %v1488
    %v1495 = vsel %vm215, %v1491, %v1489
    %v1496 = vmul.f32 %v1494, %v205
    %v1497 = vmul.f32 %v1495, %v205
    %v1498 = vmul.f32 %v1492, %v206
    %v1499 = vmul.f32 %v1493, %v206
    %v1500 = vpack.c.bf16 %v1498, %v1496
    %v1501 = vpack.c.bf16 %v1499, %v1497
    %v1502 = vrot.slane %v1484, 1
    %v1503 = vrot.slane %v1485, 1
    %v1504 = vrot.slane %v1486, 1
    %v1505 = vrot.slane %v1487, 1
    %v1506 = vsel %vm223, %v1502, %v1504
    %v1507 = vsel %vm223, %v1503, %v1505
    %v1508 = vsel %vm223, %v1504, %v1502
    %v1509 = vsel %vm223, %v1505, %v1503
    %v1510 = vmul.f32 %v1506, %v211
    %v1511 = vmul.f32 %v1507, %v211
    %v1512 = vmul.f32 %v1508, %v212
    %v1513 = vmul.f32 %v1509, %v212
    %v1514 = vpack.c.bf16 %v1512, %v1510
    %v1515 = vpack.c.bf16 %v1513, %v1511
    %v1516 = vpack.c.bf16 %v1486, %v1484
    %v1517 = vpack.c.bf16 %v1487, %v1485
    %v1518 = vld [vmem:[#allocation13] sm:$0xff]
    %v1519 = vld [vmem:[#allocation13 + $0x8] sm:$0xff]
    %v1520 = vld [vmem:[#allocation13 + $0x10] sm:$0xff]
    %v1521 = vld [vmem:[#allocation13 + $0x18] sm:$0xff]
    %v1522 = vld [vmem:[#allocation13 + $0x20] sm:$0xff]
    %v1523 = vld [vmem:[#allocation13 + $0x28] sm:$0xff]
    %v1524 = vld [vmem:[#allocation13 + $0x30] sm:$0xff]
    %v1525 = vld [vmem:[#allocation13 + $0x38] sm:$0xff]
    %v1526 = vld [vmem:[#allocation13 + $0x40] sm:$0xff]
    %v1527 = vld [vmem:[#allocation13 + $0x48] sm:$0xff]
    %v1528 = vld [vmem:[#allocation13 + $0x50] sm:$0xff]
    %v1529 = vld [vmem:[#allocation13 + $0x58] sm:$0xff]
    %v1530 = vld [vmem:[#allocation13 + $0x60] sm:$0xff]
    %v1531 = vld [vmem:[#allocation13 + $0x68] sm:$0xff]
    %v1532 = vld [vmem:[#allocation13 + $0x70] sm:$0xff]
    %v1533 = vld [vmem:[#allocation13 + $0x78] sm:$0xff]
    %v1534 = vld [vmem:[#allocation13 + $0x80] sm:$0xff]
    %v1535 = vld [vmem:[#allocation13 + $0x88] sm:$0xff]
    %v1536 = vld [vmem:[#allocation13 + $0x90] sm:$0xff]
    %v1537 = vld [vmem:[#allocation13 + $0x98] sm:$0xff]
    %v1538 = vld [vmem:[#allocation13 + $0xa0] sm:$0xff]
    %v1539 = vld [vmem:[#allocation13 + $0xa8] sm:$0xff]
    %v1540 = vld [vmem:[#allocation13 + $0xb0] sm:$0xff]
    %v1541 = vld [vmem:[#allocation13 + $0xb8] sm:$0xff]
    %v1542 = vld [vmem:[#allocation13 + $0xc0] sm:$0xff]
    %v1543 = vld [vmem:[#allocation13 + $0xc8] sm:$0xff]
    %v1544 = vld [vmem:[#allocation13 + $0xd0] sm:$0xff]
    %v1545 = vld [vmem:[#allocation13 + $0xd8] sm:$0xff]
    %v1546 = vld [vmem:[#allocation13 + $0xe0] sm:$0xff]
    %v1547 = vld [vmem:[#allocation13 + $0xe8] sm:$0xff]
    %v1548 = vld [vmem:[#allocation13 + $0xf0] sm:$0xff]
    %v1549 = vld [vmem:[#allocation13 + $0xf8] sm:$0xff]
    %s1550 = scalar_lea.vmem [#allocation13], 256
    %v1551 = vld [vmem:[%s1550] sm:$0xff]
    %v1552 = vld [vmem:[%s1550 + $0x8] sm:$0xff]
    %v1553 = vld [vmem:[%s1550 + $0x10] sm:$0xff]
    %v1554 = vld [vmem:[%s1550 + $0x18] sm:$0xff]
    %v1555 = vld [vmem:[%s1550 + $0x20] sm:$0xff]
    %v1556 = vld [vmem:[%s1550 + $0x28] sm:$0xff]
    %v1557 = vld [vmem:[%s1550 + $0x30] sm:$0xff]
    %v1558 = vld [vmem:[%s1550 + $0x38] sm:$0xff]
    %v1559 = vld [vmem:[%s1550 + $0x40] sm:$0xff]
    %v1560 = vld [vmem:[%s1550 + $0x48] sm:$0xff]
    %v1561 = vld [vmem:[%s1550 + $0x50] sm:$0xff]
    %v1562 = vld [vmem:[%s1550 + $0x58] sm:$0xff]
    %v1563 = vld [vmem:[%s1550 + $0x60] sm:$0xff]
    %v1564 = vld [vmem:[%s1550 + $0x68] sm:$0xff]
    %v1565 = vld [vmem:[%s1550 + $0x70] sm:$0xff]
    %v1566 = vld [vmem:[%s1550 + $0x78] sm:$0xff]
    %v1567 = vld [vmem:[%s1550 + $0x80] sm:$0xff]
    %v1568 = vld [vmem:[%s1550 + $0x88] sm:$0xff]
    %v1569 = vld [vmem:[%s1550 + $0x90] sm:$0xff]
    %v1570 = vld [vmem:[%s1550 + $0x98] sm:$0xff]
    %v1571 = vld [vmem:[%s1550 + $0xa0] sm:$0xff]
    %v1572 = vld [vmem:[%s1550 + $0xa8] sm:$0xff]
    %v1573 = vld [vmem:[%s1550 + $0xb0] sm:$0xff]
    %v1574 = vld [vmem:[%s1550 + $0xb8] sm:$0xff]
    %v1575 = vld [vmem:[%s1550 + $0xc0] sm:$0xff]
    %v1576 = vld [vmem:[%s1550 + $0xc8] sm:$0xff]
    %v1577 = vld [vmem:[%s1550 + $0xd0] sm:$0xff]
    %v1578 = vld [vmem:[%s1550 + $0xd8] sm:$0xff]
    %v1579 = vld [vmem:[%s1550 + $0xe0] sm:$0xff]
    %v1580 = vld [vmem:[%s1550 + $0xe8] sm:$0xff]
    %v1581 = vld [vmem:[%s1550 + $0xf0] sm:$0xff]
    %v1582 = vld [vmem:[%s1550 + $0xf8] sm:$0xff]
    %v1615 = vunpack.c.l.b16 %v1551
    %v1616 = vunpack.c.h.b16 %v1551
    %v1617 = vunpack.c.l.b16 %v1552
    %v1618 = vunpack.c.h.b16 %v1552
    %v1619 = vunpack.c.l.b16 %v1553
    %v1620 = vunpack.c.h.b16 %v1553
    %v1621 = vunpack.c.l.b16 %v1554
    %v1622 = vunpack.c.h.b16 %v1554
    %v1623 = vunpack.c.l.b16 %v1555
    %v1624 = vunpack.c.h.b16 %v1555
    %v1625 = vunpack.c.l.b16 %v1556
    %v1626 = vunpack.c.h.b16 %v1556
    %v1627 = vunpack.c.l.b16 %v1557
    %v1628 = vunpack.c.h.b16 %v1557
    %v1629 = vunpack.c.l.b16 %v1558
    %v1630 = vunpack.c.h.b16 %v1558
    %v1631 = vunpack.c.l.b16 %v1559
    %v1632 = vunpack.c.h.b16 %v1559
    %v1633 = vunpack.c.l.b16 %v1560
    %v1634 = vunpack.c.h.b16 %v1560
    %v1635 = vunpack.c.l.b16 %v1561
    %v1636 = vunpack.c.h.b16 %v1561
    %v1637 = vunpack.c.l.b16 %v1562
    %v1638 = vunpack.c.h.b16 %v1562
    %v1639 = vunpack.c.l.b16 %v1563
    %v1640 = vunpack.c.h.b16 %v1563
    %v1641 = vunpack.c.l.b16 %v1564
    %v1642 = vunpack.c.h.b16 %v1564
    %v1643 = vunpack.c.l.b16 %v1565
    %v1644 = vunpack.c.h.b16 %v1565
    %v1645 = vunpack.c.l.b16 %v1566
    %v1646 = vunpack.c.h.b16 %v1566
    %v1647 = vunpack.c.l.b16 %v1567
    %v1648 = vunpack.c.h.b16 %v1567
    %v1649 = vunpack.c.l.b16 %v1568
    %v1650 = vunpack.c.h.b16 %v1568
    %v1651 = vunpack.c.l.b16 %v1569
    %v1652 = vunpack.c.h.b16 %v1569
    %v1653 = vunpack.c.l.b16 %v1570
    %v1654 = vunpack.c.h.b16 %v1570
    %v1655 = vunpack.c.l.b16 %v1571
    %v1656 = vunpack.c.h.b16 %v1571
    %v1657 = vunpack.c.l.b16 %v1572
    %v1658 = vunpack.c.h.b16 %v1572
    %v1659 = vunpack.c.l.b16 %v1573
    %v1660 = vunpack.c.h.b16 %v1573
    %v1661 = vunpack.c.l.b16 %v1574
    %v1662 = vunpack.c.h.b16 %v1574
    %v1663 = vunpack.c.l.b16 %v1575
    %v1664 = vunpack.c.h.b16 %v1575
    %v1665 = vunpack.c.l.b16 %v1576
    %v1666 = vunpack.c.h.b16 %v1576
    %v1667 = vunpack.c.l.b16 %v1577
    %v1668 = vunpack.c.h.b16 %v1577
    %v1669 = vunpack.c.l.b16 %v1578
    %v1670 = vunpack.c.h.b16 %v1578
    %v1671 = vunpack.c.l.b16 %v1579
    %v1672 = vunpack.c.h.b16 %v1579
    %v1673 = vunpack.c.l.b16 %v1580
    %v1674 = vunpack.c.h.b16 %v1580
    %v1675 = vunpack.c.l.b16 %v1581
    %v1676 = vunpack.c.h.b16 %v1581
    %v1677 = vunpack.c.l.b16 %v1582
    %v1678 = vunpack.c.h.b16 %v1582
    %v1679 = vpack.c.b16 %v1617, %v1615
    %v1680 = vpack.c.b16 %v1618, %v1616
    %v1681 = vpack.c.b16 %v1621, %v1619
    %v1682 = vpack.c.b16 %v1622, %v1620
    %v1683 = vpack.c.b16 %v1625, %v1623
    %v1684 = vpack.c.b16 %v1626, %v1624
    %v1685 = vpack.c.b16 %v1629, %v1627
    %v1686 = vpack.c.b16 %v1630, %v1628
    %v1687 = vpack.c.b16 %v1633, %v1631
    %v1688 = vpack.c.b16 %v1634, %v1632
    %v1689 = vpack.c.b16 %v1637, %v1635
    %v1690 = vpack.c.b16 %v1638, %v1636
    %v1691 = vpack.c.b16 %v1641, %v1639
    %v1692 = vpack.c.b16 %v1642, %v1640
    %v1693 = vpack.c.b16 %v1645, %v1643
    %v1694 = vpack.c.b16 %v1646, %v1644
    %v1695 = vpack.c.b16 %v1649, %v1647
    %v1696 = vpack.c.b16 %v1650, %v1648
    %v1697 = vpack.c.b16 %v1653, %v1651
    %v1698 = vpack.c.b16 %v1654, %v1652
    %v1699 = vpack.c.b16 %v1657, %v1655
    %v1700 = vpack.c.b16 %v1658, %v1656
    %v1701 = vpack.c.b16 %v1661, %v1659
    %v1702 = vpack.c.b16 %v1662, %v1660
    %v1703 = vpack.c.b16 %v1665, %v1663
    %v1704 = vpack.c.b16 %v1666, %v1664
    %v1705 = vpack.c.b16 %v1669, %v1667
    %v1706 = vpack.c.b16 %v1670, %v1668
    %v1707 = vpack.c.b16 %v1673, %v1671
    %v1708 = vpack.c.b16 %v1674, %v1672
    %v1709 = vpack.c.b16 %v1677, %v1675
    %v1710 = vpack.c.b16 %v1678, %v1676
    %1743 = vmatprep.subr.bf16.mxu0 %v1694
    %1744 = vmatpush1.bf16.msra.mxu0 %v1693
    %1745 = vmatprep.subr.bf16.mxu0 %v1692
    %1746 = vmatpush1.bf16.msra.mxu0 %v1691
    %1747 = vmatprep.subr.bf16.mxu0 %v1690
    %1748 = vmatpush1.bf16.msra.mxu0 %v1689
    %1749 = vmatprep.subr.bf16.mxu0 %v1688
    %1750 = vmatpush1.bf16.msra.mxu0 %v1687
    %1751 = vmatprep.subr.bf16.mxu0 %v1686
    %1752 = vmatpush1.bf16.msra.mxu0 %v1685
    %1753 = vmatprep.subr.bf16.mxu0 %v1684
    %1754 = vmatpush1.bf16.msra.mxu0 %v1683
    %1755 = vmatprep.subr.bf16.mxu0 %v1682
    %1756 = vmatpush1.bf16.msra.mxu0 %v1681
    %1757 = vmatprep.subr.bf16.mxu0 %v1680
    %1758 = vmatpush1.bf16.msra.mxu0 %v1679
    %1759 = vmatprep.subr.bf16.mxu0 %v1710
    %1760 = vmatpush2.bf16.msra.mxu0 %v1709
    %1761 = vmatprep.subr.bf16.mxu0 %v1708
    %1762 = vmatpush2.bf16.msra.mxu0 %v1707
    %1763 = vmatprep.subr.bf16.mxu0 %v1706
    %1764 = vmatpush2.bf16.msra.mxu0 %v1705
    %1765 = vmatprep.subr.bf16.mxu0 %v1704
    %1766 = vmatpush2.bf16.msra.mxu0 %v1703
    %1767 = vmatprep.subr.bf16.mxu0 %v1702
    %1768 = vmatpush2.bf16.msra.mxu0 %v1701
    %1769 = vmatprep.subr.bf16.mxu0 %v1700
    %1770 = vmatpush2.bf16.msra.mxu0 %v1699
    %1771 = vmatprep.subr.bf16.mxu0 %v1698
    %1772 = vmatpush2.bf16.msra.mxu0 %v1697
    %1773 = vmatprep.subr.bf16.mxu0 %v1696
    %1774 = vmatpush2.bf16.msra.mxu0 %v1695
    %1775 = vmatprep.mubr.bf16.mxu0 %v1517
    %1776 = vmatmul.mubr.bf16.gmra.mxu0 %v1516
    %v1777 = vpop.f32.mrf.mxu0
    %v1778 = vadd.f32 0.0, %v1777
    %v1779 = vpop.f32.mrf.mxu0
    %v1780 = vadd.f32 0.0, %v1779
    %v1781 = vpop.f32.mrf.mxu0
    %v1782 = vadd.f32 0.0, %v1781
    %v1783 = vpop.f32.mrf.mxu0
    %v1784 = vadd.f32 0.0, %v1783
    %1785 = vdwg.mxu0
    %v1818 = vunpack.c.l.b16 %v1518
    %v1819 = vunpack.c.h.b16 %v1518
    %v1820 = vunpack.c.l.b16 %v1519
    %v1821 = vunpack.c.h.b16 %v1519
    %v1822 = vunpack.c.l.b16 %v1520
    %v1823 = vunpack.c.h.b16 %v1520
    %v1824 = vunpack.c.l.b16 %v1521
    %v1825 = vunpack.c.h.b16 %v1521
    %v1826 = vunpack.c.l.b16 %v1522
    %v1827 = vunpack.c.h.b16 %v1522
    %v1828 = vunpack.c.l.b16 %v1523
    %v1829 = vunpack.c.h.b16 %v1523
    %v1830 = vunpack.c.l.b16 %v1524
    %v1831 = vunpack.c.h.b16 %v1524
    %v1832 = vunpack.c.l.b16 %v1525
    %v1833 = vunpack.c.h.b16 %v1525
    %v1834 = vunpack.c.l.b16 %v1526
    %v1835 = vunpack.c.h.b16 %v1526
    %v1836 = vunpack.c.l.b16 %v1527
    %v1837 = vunpack.c.h.b16 %v1527
    %v1838 = vunpack.c.l.b16 %v1528
    %v1839 = vunpack.c.h.b16 %v1528
    %v1840 = vunpack.c.l.b16 %v1529
    %v1841 = vunpack.c.h.b16 %v1529
    %v1842 = vunpack.c.l.b16 %v1530
    %v1843 = vunpack.c.h.b16 %v1530
    %v1844 = vunpack.c.l.b16 %v1531
    %v1845 = vunpack.c.h.b16 %v1531
    %v1846 = vunpack.c.l.b16 %v1532
    %v1847 = vunpack.c.h.b16 %v1532
    %v1848 = vunpack.c.l.b16 %v1533
    %v1849 = vunpack.c.h.b16 %v1533
    %v1850 = vunpack.c.l.b16 %v1534
    %v1851 = vunpack.c.h.b16 %v1534
    %v1852 = vunpack.c.l.b16 %v1535
    %v1853 = vunpack.c.h.b16 %v1535
    %v1854 = vunpack.c.l.b16 %v1536
    %v1855 = vunpack.c.h.b16 %v1536
    %v1856 = vunpack.c.l.b16 %v1537
    %v1857 = vunpack.c.h.b16 %v1537
    %v1858 = vunpack.c.l.b16 %v1538
    %v1859 = vunpack.c.h.b16 %v1538
    %v1860 = vunpack.c.l.b16 %v1539
    %v1861 = vunpack.c.h.b16 %v1539
    %v1862 = vunpack.c.l.b16 %v1540
    %v1863 = vunpack.c.h.b16 %v1540
    %v1864 = vunpack.c.l.b16 %v1541
    %v1865 = vunpack.c.h.b16 %v1541
    %v1866 = vunpack.c.l.b16 %v1542
    %v1867 = vunpack.c.h.b16 %v1542
    %v1868 = vunpack.c.l.b16 %v1543
    %v1869 = vunpack.c.h.b16 %v1543
    %v1870 = vunpack.c.l.b16 %v1544
    %v1871 = vunpack.c.h.b16 %v1544
    %v1872 = vunpack.c.l.b16 %v1545
    %v1873 = vunpack.c.h.b16 %v1545
    %v1874 = vunpack.c.l.b16 %v1546
    %v1875 = vunpack.c.h.b16 %v1546
    %v1876 = vunpack.c.l.b16 %v1547
    %v1877 = vunpack.c.h.b16 %v1547
    %v1878 = vunpack.c.l.b16 %v1548
    %v1879 = vunpack.c.h.b16 %v1548
    %v1880 = vunpack.c.l.b16 %v1549
    %v1881 = vunpack.c.h.b16 %v1549
    %v1882 = vpack.c.b16 %v1820, %v1818
    %v1883 = vpack.c.b16 %v1821, %v1819
    %v1884 = vpack.c.b16 %v1824, %v1822
    %v1885 = vpack.c.b16 %v1825, %v1823
    %v1886 = vpack.c.b16 %v1828, %v1826
    %v1887 = vpack.c.b16 %v1829, %v1827
    %v1888 = vpack.c.b16 %v1832, %v1830
    %v1889 = vpack.c.b16 %v1833, %v1831
    %v1890 = vpack.c.b16 %v1836, %v1834
    %v1891 = vpack.c.b16 %v1837, %v1835
    %v1892 = vpack.c.b16 %v1840, %v1838
    %v1893 = vpack.c.b16 %v1841, %v1839
    %v1894 = vpack.c.b16 %v1844, %v1842
    %v1895 = vpack.c.b16 %v1845, %v1843
    %v1896 = vpack.c.b16 %v1848, %v1846
    %v1897 = vpack.c.b16 %v1849, %v1847
    %v1898 = vpack.c.b16 %v1852, %v1850
    %v1899 = vpack.c.b16 %v1853, %v1851
    %v1900 = vpack.c.b16 %v1856, %v1854
    %v1901 = vpack.c.b16 %v1857, %v1855
    %v1902 = vpack.c.b16 %v1860, %v1858
    %v1903 = vpack.c.b16 %v1861, %v1859
    %v1904 = vpack.c.b16 %v1864, %v1862
    %v1905 = vpack.c.b16 %v1865, %v1863
    %v1906 = vpack.c.b16 %v1868, %v1866
    %v1907 = vpack.c.b16 %v1869, %v1867
    %v1908 = vpack.c.b16 %v1872, %v1870
    %v1909 = vpack.c.b16 %v1873, %v1871
    %v1910 = vpack.c.b16 %v1876, %v1874
    %v1911 = vpack.c.b16 %v1877, %v1875
    %v1912 = vpack.c.b16 %v1880, %v1878
    %v1913 = vpack.c.b16 %v1881, %v1879
    %1946 = vmatprep.subr.bf16.mxu0 %v1897
    %1947 = vmatpush1.bf16.msra.mxu0 %v1896
    %1948 = vmatprep.subr.bf16.mxu0 %v1895
    %1949 = vmatpush1.bf16.msra.mxu0 %v1894
    %1950 = vmatprep.subr.bf16.mxu0 %v1893
    %1951 = vmatpush1.bf16.msra.mxu0 %v1892
    %1952 = vmatprep.subr.bf16.mxu0 %v1891
    %1953 = vmatpush1.bf16.msra.mxu0 %v1890
    %1954 = vmatprep.subr.bf16.mxu0 %v1889
    %1955 = vmatpush1.bf16.msra.mxu0 %v1888
    %1956 = vmatprep.subr.bf16.mxu0 %v1887
    %1957 = vmatpush1.bf16.msra.mxu0 %v1886
    %1958 = vmatprep.subr.bf16.mxu0 %v1885
    %1959 = vmatpush1.bf16.msra.mxu0 %v1884
    %1960 = vmatprep.subr.bf16.mxu0 %v1883
    %1961 = vmatpush1.bf16.msra.mxu0 %v1882
    %1962 = vmatprep.subr.bf16.mxu0 %v1913
    %1963 = vmatpush2.bf16.msra.mxu0 %v1912
    %1964 = vmatprep.subr.bf16.mxu0 %v1911
    %1965 = vmatpush2.bf16.msra.mxu0 %v1910
    %1966 = vmatprep.subr.bf16.mxu0 %v1909
    %1967 = vmatpush2.bf16.msra.mxu0 %v1908
    %1968 = vmatprep.subr.bf16.mxu0 %v1907
    %1969 = vmatpush2.bf16.msra.mxu0 %v1906
    %1970 = vmatprep.subr.bf16.mxu0 %v1905
    %1971 = vmatpush2.bf16.msra.mxu0 %v1904
    %1972 = vmatprep.subr.bf16.mxu0 %v1903
    %1973 = vmatpush2.bf16.msra.mxu0 %v1902
    %1974 = vmatprep.subr.bf16.mxu0 %v1901
    %1975 = vmatpush2.bf16.msra.mxu0 %v1900
    %1976 = vmatprep.subr.bf16.mxu0 %v1899
    %1977 = vmatpush2.bf16.msra.mxu0 %v1898
    %1978 = vmatprep.mubr.bf16.mxu0 %v1501
    %1979 = vmatmul.mubr.bf16.gmra.mxu0 %v1500
    %v1980 = vpop.f32.mrf.mxu0
    %v1981 = vadd.f32 %v1778, %v1980
    %v1982 = vpop.f32.mrf.mxu0
    %v1983 = vadd.f32 %v1780, %v1982
    %v1984 = vpop.f32.mrf.mxu0
    %v1985 = vadd.f32 %v1782, %v1984
    %v1986 = vpop.f32.mrf.mxu0
    %v1987 = vadd.f32 %v1784, %v1986
    %1988 = vdwg.mxu0
    %s1989 = scalar_lea.vmem [#allocation13], 512
    %v1990 = vld [vmem:[%s1989] sm:$0xff]
    %v1991 = vld [vmem:[%s1989 + $0x8] sm:$0xff]
    %v1992 = vld [vmem:[%s1989 + $0x10] sm:$0xff]
    %v1993 = vld [vmem:[%s1989 + $0x18] sm:$0xff]
    %v1994 = vld [vmem:[%s1989 + $0x20] sm:$0xff]
    %v1995 = vld [vmem:[%s1989 + $0x28] sm:$0xff]
    %v1996 = vld [vmem:[%s1989 + $0x30] sm:$0xff]
    %v1997 = vld [vmem:[%s1989 + $0x38] sm:$0xff]
    %v1998 = vld [vmem:[%s1989 + $0x40] sm:$0xff]
    %v1999 = vld [vmem:[%s1989 + $0x48] sm:$0xff]
    %v2000 = vld [vmem:[%s1989 + $0x50] sm:$0xff]
    %v2001 = vld [vmem:[%s1989 + $0x58] sm:$0xff]
    %v2002 = vld [vmem:[%s1989 + $0x60] sm:$0xff]
    %v2003 = vld [vmem:[%s1989 + $0x68] sm:$0xff]
    %v2004 = vld [vmem:[%s1989 + $0x70] sm:$0xff]
    %v2005 = vld [vmem:[%s1989 + $0x78] sm:$0xff]
    %v2006 = vld [vmem:[%s1989 + $0x80] sm:$0xff]
    %v2007 = vld [vmem:[%s1989 + $0x88] sm:$0xff]
    %v2008 = vld [vmem:[%s1989 + $0x90] sm:$0xff]
    %v2009 = vld [vmem:[%s1989 + $0x98] sm:$0xff]
    %v2010 = vld [vmem:[%s1989 + $0xa0] sm:$0xff]
    %v2011 = vld [vmem:[%s1989 + $0xa8] sm:$0xff]
    %v2012 = vld [vmem:[%s1989 + $0xb0] sm:$0xff]
    %v2013 = vld [vmem:[%s1989 + $0xb8] sm:$0xff]
    %v2014 = vld [vmem:[%s1989 + $0xc0] sm:$0xff]
    %v2015 = vld [vmem:[%s1989 + $0xc8] sm:$0xff]
    %v2016 = vld [vmem:[%s1989 + $0xd0] sm:$0xff]
    %v2017 = vld [vmem:[%s1989 + $0xd8] sm:$0xff]
    %v2018 = vld [vmem:[%s1989 + $0xe0] sm:$0xff]
    %v2019 = vld [vmem:[%s1989 + $0xe8] sm:$0xff]
    %v2020 = vld [vmem:[%s1989 + $0xf0] sm:$0xff]
    %v2021 = vld [vmem:[%s1989 + $0xf8] sm:$0xff]
    %v2054 = vunpack.c.l.b16 %v1990
    %v2055 = vunpack.c.h.b16 %v1990
    %v2056 = vunpack.c.l.b16 %v1991
    %v2057 = vunpack.c.h.b16 %v1991
    %v2058 = vunpack.c.l.b16 %v1992
    %v2059 = vunpack.c.h.b16 %v1992
    %v2060 = vunpack.c.l.b16 %v1993
    %v2061 = vunpack.c.h.b16 %v1993
    %v2062 = vunpack.c.l.b16 %v1994
    %v2063 = vunpack.c.h.b16 %v1994
    %v2064 = vunpack.c.l.b16 %v1995
    %v2065 = vunpack.c.h.b16 %v1995
    %v2066 = vunpack.c.l.b16 %v1996
    %v2067 = vunpack.c.h.b16 %v1996
    %v2068 = vunpack.c.l.b16 %v1997
    %v2069 = vunpack.c.h.b16 %v1997
    %v2070 = vunpack.c.l.b16 %v1998
    %v2071 = vunpack.c.h.b16 %v1998
    %v2072 = vunpack.c.l.b16 %v1999
    %v2073 = vunpack.c.h.b16 %v1999
    %v2074 = vunpack.c.l.b16 %v2000
    %v2075 = vunpack.c.h.b16 %v2000
    %v2076 = vunpack.c.l.b16 %v2001
    %v2077 = vunpack.c.h.b16 %v2001
    %v2078 = vunpack.c.l.b16 %v2002
    %v2079 = vunpack.c.h.b16 %v2002
    %v2080 = vunpack.c.l.b16 %v2003
    %v2081 = vunpack.c.h.b16 %v2003
    %v2082 = vunpack.c.l.b16 %v2004
    %v2083 = vunpack.c.h.b16 %v2004
    %v2084 = vunpack.c.l.b16 %v2005
    %v2085 = vunpack.c.h.b16 %v2005
    %v2086 = vunpack.c.l.b16 %v2006
    %v2087 = vunpack.c.h.b16 %v2006
    %v2088 = vunpack.c.l.b16 %v2007
    %v2089 = vunpack.c.h.b16 %v2007
    %v2090 = vunpack.c.l.b16 %v2008
    %v2091 = vunpack.c.h.b16 %v2008
    %v2092 = vunpack.c.l.b16 %v2009
    %v2093 = vunpack.c.h.b16 %v2009
    %v2094 = vunpack.c.l.b16 %v2010
    %v2095 = vunpack.c.h.b16 %v2010
    %v2096 = vunpack.c.l.b16 %v2011
    %v2097 = vunpack.c.h.b16 %v2011
    %v2098 = vunpack.c.l.b16 %v2012
    %v2099 = vunpack.c.h.b16 %v2012
    %v2100 = vunpack.c.l.b16 %v2013
    %v2101 = vunpack.c.h.b16 %v2013
    %v2102 = vunpack.c.l.b16 %v2014
    %v2103 = vunpack.c.h.b16 %v2014
    %v2104 = vunpack.c.l.b16 %v2015
    %v2105 = vunpack.c.h.b16 %v2015
    %v2106 = vunpack.c.l.b16 %v2016
    %v2107 = vunpack.c.h.b16 %v2016
    %v2108 = vunpack.c.l.b16 %v2017
    %v2109 = vunpack.c.h.b16 %v2017
    %v2110 = vunpack.c.l.b16 %v2018
    %v2111 = vunpack.c.h.b16 %v2018
    %v2112 = vunpack.c.l.b16 %v2019
    %v2113 = vunpack.c.h.b16 %v2019
    %v2114 = vunpack.c.l.b16 %v2020
    %v2115 = vunpack.c.h.b16 %v2020
    %v2116 = vunpack.c.l.b16 %v2021
    %v2117 = vunpack.c.h.b16 %v2021
    %v2118 = vpack.c.b16 %v2056, %v2054
    %v2119 = vpack.c.b16 %v2057, %v2055
    %v2120 = vpack.c.b16 %v2060, %v2058
    %v2121 = vpack.c.b16 %v2061, %v2059
    %v2122 = vpack.c.b16 %v2064, %v2062
    %v2123 = vpack.c.b16 %v2065, %v2063
    %v2124 = vpack.c.b16 %v2068, %v2066
    %v2125 = vpack.c.b16 %v2069, %v2067
    %v2126 = vpack.c.b16 %v2072, %v2070
    %v2127 = vpack.c.b16 %v2073, %v2071
    %v2128 = vpack.c.b16 %v2076, %v2074
    %v2129 = vpack.c.b16 %v2077, %v2075
    %v2130 = vpack.c.b16 %v2080, %v2078
    %v2131 = vpack.c.b16 %v2081, %v2079
    %v2132 = vpack.c.b16 %v2084, %v2082
    %v2133 = vpack.c.b16 %v2085, %v2083
    %v2134 = vpack.c.b16 %v2088, %v2086
    %v2135 = vpack.c.b16 %v2089, %v2087
    %v2136 = vpack.c.b16 %v2092, %v2090
    %v2137 = vpack.c.b16 %v2093, %v2091
    %v2138 = vpack.c.b16 %v2096, %v2094
    %v2139 = vpack.c.b16 %v2097, %v2095
    %v2140 = vpack.c.b16 %v2100, %v2098
    %v2141 = vpack.c.b16 %v2101, %v2099
    %v2142 = vpack.c.b16 %v2104, %v2102
    %v2143 = vpack.c.b16 %v2105, %v2103
    %v2144 = vpack.c.b16 %v2108, %v2106
    %v2145 = vpack.c.b16 %v2109, %v2107
    %v2146 = vpack.c.b16 %v2112, %v2110
    %v2147 = vpack.c.b16 %v2113, %v2111
    %v2148 = vpack.c.b16 %v2116, %v2114
    %v2149 = vpack.c.b16 %v2117, %v2115
    %2182 = vmatprep.subr.bf16.mxu0 %v2133
    %2183 = vmatpush1.bf16.msra.mxu0 %v2132
    %2184 = vmatprep.subr.bf16.mxu0 %v2131
    %2185 = vmatpush1.bf16.msra.mxu0 %v2130
    %2186 = vmatprep.subr.bf16.mxu0 %v2129
    %2187 = vmatpush1.bf16.msra.mxu0 %v2128
    %2188 = vmatprep.subr.bf16.mxu0 %v2127
    %2189 = vmatpush1.bf16.msra.mxu0 %v2126
    %2190 = vmatprep.subr.bf16.mxu0 %v2125
    %2191 = vmatpush1.bf16.msra.mxu0 %v2124
    %2192 = vmatprep.subr.bf16.mxu0 %v2123
    %2193 = vmatpush1.bf16.msra.mxu0 %v2122
    %2194 = vmatprep.subr.bf16.mxu0 %v2121
    %2195 = vmatpush1.bf16.msra.mxu0 %v2120
    %2196 = vmatprep.subr.bf16.mxu0 %v2119
    %2197 = vmatpush1.bf16.msra.mxu0 %v2118
    %2198 = vmatprep.subr.bf16.mxu0 %v2149
    %2199 = vmatpush2.bf16.msra.mxu0 %v2148
    %2200 = vmatprep.subr.bf16.mxu0 %v2147
    %2201 = vmatpush2.bf16.msra.mxu0 %v2146
    %2202 = vmatprep.subr.bf16.mxu0 %v2145
    %2203 = vmatpush2.bf16.msra.mxu0 %v2144
    %2204 = vmatprep.subr.bf16.mxu0 %v2143
    %2205 = vmatpush2.bf16.msra.mxu0 %v2142
    %2206 = vmatprep.subr.bf16.mxu0 %v2141
    %2207 = vmatpush2.bf16.msra.mxu0 %v2140
    %2208 = vmatprep.subr.bf16.mxu0 %v2139
    %2209 = vmatpush2.bf16.msra.mxu0 %v2138
    %2210 = vmatprep.subr.bf16.mxu0 %v2137
    %2211 = vmatpush2.bf16.msra.mxu0 %v2136
    %2212 = vmatprep.subr.bf16.mxu0 %v2135
    %2213 = vmatpush2.bf16.msra.mxu0 %v2134
    %2214 = vmatprep.mubr.bf16.mxu0 %v1515
    %2215 = vmatmul.mubr.bf16.gmra.mxu0 %v1514
    %v2216 = vpop.f32.mrf.mxu0
    %v2217 = vadd.f32 0.0, %v2216
    %v2218 = vpop.f32.mrf.mxu0
    %v2219 = vadd.f32 0.0, %v2218
    %v2220 = vpop.f32.mrf.mxu0
    %v2221 = vadd.f32 0.0, %v2220
    %v2222 = vpop.f32.mrf.mxu0
    %v2223 = vadd.f32 0.0, %v2222
    %2224 = vdwg.mxu0
    %v2225 = vadd.f32 %v1981, %v2217
    %v2226 = vadd.f32 %v1983, %v2219
    %v2227 = vadd.f32 %v1985, %v2221
    %v2228 = vadd.f32 %v1987, %v2223
    %v2229 = vld [vmem:[%s10] sm:$0x3]
    %v2231 = vlaneseq
    %v2232 = vshrl.u32 %v2231, 7
    %v2233 = vsub.s32 0, %v2232
    %v2234 = vrot.slane %v2229, %v2233
    %v2235 = vlaneseq
    %v2236 = vshrl.u32 %v2235, 7
    %v2237 = vsub.s32 1, %v2236
    %v2238 = vrot.slane %v2229, %v2237
    %v2241 = vadd.f32 %v2225, %v2234
    %v2242 = vadd.f32 %v2226, %v2238
    %v2243 = vadd.f32 %v2227, %v2234
    %v2244 = vadd.f32 %v2228, %v2238
    %v2245 = vmax.f32 %v2241, 0.0
    %v2246 = vmax.f32 %v2242, 0.0
    %v2247 = vmax.f32 %v2243, 0.0
    %v2248 = vmax.f32 %v2244, 0.0
    %v2249 = vpack.c.bf16 %v2247, %v2245
    %v2250 = vpack.c.bf16 %v2248, %v2246
    %v2251 = vld [vmem:[#allocation14] sm:$0xff]
    %v2252 = vld [vmem:[#allocation14 + $0x8] sm:$0xff]
    %v2253 = vld [vmem:[#allocation14 + $0x10] sm:$0xff]
    %v2254 = vld [vmem:[#allocation14 + $0x18] sm:$0xff]
    %v2255 = vld [vmem:[#allocation14 + $0x20] sm:$0xff]
    %v2256 = vld [vmem:[#allocation14 + $0x28] sm:$0xff]
    %v2257 = vld [vmem:[#allocation14 + $0x30] sm:$0xff]
    %v2258 = vld [vmem:[#allocation14 + $0x38] sm:$0xff]
    %v2259 = vld [vmem:[#allocation14 + $0x40] sm:$0xff]
    %v2260 = vld [vmem:[#allocation14 + $0x48] sm:$0xff]
    %v2261 = vld [vmem:[#allocation14 + $0x50] sm:$0xff]
    %v2262 = vld [vmem:[#allocation14 + $0x58] sm:$0xff]
    %v2263 = vld [vmem:[#allocation14 + $0x60] sm:$0xff]
    %v2264 = vld [vmem:[#allocation14 + $0x68] sm:$0xff]
    %v2265 = vld [vmem:[#allocation14 + $0x70] sm:$0xff]
    %v2266 = vld [vmem:[#allocation14 + $0x78] sm:$0xff]
    %v2267 = vld [vmem:[#allocation14 + $0x80] sm:$0xff]
    %v2268 = vld [vmem:[#allocation14 + $0x88] sm:$0xff]
    %v2269 = vld [vmem:[#allocation14 + $0x90] sm:$0xff]
    %v2270 = vld [vmem:[#allocation14 + $0x98] sm:$0xff]
    %v2271 = vld [vmem:[#allocation14 + $0xa0] sm:$0xff]
    %v2272 = vld [vmem:[#allocation14 + $0xa8] sm:$0xff]
    %v2273 = vld [vmem:[#allocation14 + $0xb0] sm:$0xff]
    %v2274 = vld [vmem:[#allocation14 + $0xb8] sm:$0xff]
    %v2275 = vld [vmem:[#allocation14 + $0xc0] sm:$0xff]
    %v2276 = vld [vmem:[#allocation14 + $0xc8] sm:$0xff]
    %v2277 = vld [vmem:[#allocation14 + $0xd0] sm:$0xff]
    %v2278 = vld [vmem:[#allocation14 + $0xd8] sm:$0xff]
    %v2279 = vld [vmem:[#allocation14 + $0xe0] sm:$0xff]
    %v2280 = vld [vmem:[#allocation14 + $0xe8] sm:$0xff]
    %v2281 = vld [vmem:[#allocation14 + $0xf0] sm:$0xff]
    %v2282 = vld [vmem:[#allocation14 + $0xf8] sm:$0xff]
    %v2283 = vld [vmem:[%s12] sm:$0x3]
    %v2285 = vlaneseq
    %v2286 = vshrl.u32 %v2285, 7
    %v2287 = vsub.s32 0, %v2286
    %v2288 = vrot.slane %v2283, %v2287
    %v2289 = vlaneseq
    %v2290 = vshrl.u32 %v2289, 7
    %v2291 = vsub.s32 1, %v2290
    %v2292 = vrot.slane %v2283, %v2291
    %v2327 = vunpack.c.l.b16 %v2251
    %v2328 = vunpack.c.h.b16 %v2251
    %v2329 = vunpack.c.l.b16 %v2252
    %v2330 = vunpack.c.h.b16 %v2252
    %v2331 = vunpack.c.l.b16 %v2253
    %v2332 = vunpack.c.h.b16 %v2253
    %v2333 = vunpack.c.l.b16 %v2254
    %v2334 = vunpack.c.h.b16 %v2254
    %v2335 = vunpack.c.l.b16 %v2255
    %v2336 = vunpack.c.h.b16 %v2255
    %v2337 = vunpack.c.l.b16 %v2256
    %v2338 = vunpack.c.h.b16 %v2256
    %v2339 = vunpack.c.l.b16 %v2257
    %v2340 = vunpack.c.h.b16 %v2257
    %v2341 = vunpack.c.l.b16 %v2258
    %v2342 = vunpack.c.h.b16 %v2258
    %v2343 = vunpack.c.l.b16 %v2259
    %v2344 = vunpack.c.h.b16 %v2259
    %v2345 = vunpack.c.l.b16 %v2260
    %v2346 = vunpack.c.h.b16 %v2260
    %v2347 = vunpack.c.l.b16 %v2261
    %v2348 = vunpack.c.h.b16 %v2261
    %v2349 = vunpack.c.l.b16 %v2262
    %v2350 = vunpack.c.h.b16 %v2262
    %v2351 = vunpack.c.l.b16 %v2263
    %v2352 = vunpack.c.h.b16 %v2263
    %v2353 = vunpack.c.l.b16 %v2264
    %v2354 = vunpack.c.h.b16 %v2264
    %v2355 = vunpack.c.l.b16 %v2265
    %v2356 = vunpack.c.h.b16 %v2265
    %v2357 = vunpack.c.l.b16 %v2266
    %v2358 = vunpack.c.h.b16 %v2266
    %v2359 = vunpack.c.l.b16 %v2267
    %v2360 = vunpack.c.h.b16 %v2267
    %v2361 = vunpack.c.l.b16 %v2268
    %v2362 = vunpack.c.h.b16 %v2268
    %v2363 = vunpack.c.l.b16 %v2269
    %v2364 = vunpack.c.h.b16 %v2269
    %v2365 = vunpack.c.l.b16 %v2270
    %v2366 = vunpack.c.h.b16 %v2270
    %v2367 = vunpack.c.l.b16 %v2271
    %v2368 = vunpack.c.h.b16 %v2271
    %v2369 = vunpack.c.l.b16 %v2272
    %v2370 = vunpack.c.h.b16 %v2272
    %v2371 = vunpack.c.l.b16 %v2273
    %v2372 = vunpack.c.h.b16 %v2273
    %v2373 = vunpack.c.l.b16 %v2274
    %v2374 = vunpack.c.h.b16 %v2274
    %v2375 = vunpack.c.l.b16 %v2275
    %v2376 = vunpack.c.h.b16 %v2275
    %v2377 = vunpack.c.l.b16 %v2276
    %v2378 = vunpack.c.h.b16 %v2276
    %v2379 = vunpack.c.l.b16 %v2277
    %v2380 = vunpack.c.h.b16 %v2277
    %v2381 = vunpack.c.l.b16 %v2278
    %v2382 = vunpack.c.h.b16 %v2278
    %v2383 = vunpack.c.l.b16 %v2279
    %v2384 = vunpack.c.h.b16 %v2279
    %v2385 = vunpack.c.l.b16 %v2280
    %v2386 = vunpack.c.h.b16 %v2280
    %v2387 = vunpack.c.l.b16 %v2281
    %v2388 = vunpack.c.h.b16 %v2281
    %v2389 = vunpack.c.l.b16 %v2282
    %v2390 = vunpack.c.h.b16 %v2282
    %v2391 = vpack.c.b16 %v2329, %v2327
    %v2392 = vpack.c.b16 %v2330, %v2328
    %v2393 = vpack.c.b16 %v2333, %v2331
    %v2394 = vpack.c.b16 %v2334, %v2332
    %v2395 = vpack.c.b16 %v2337, %v2335
    %v2396 = vpack.c.b16 %v2338, %v2336
    %v2397 = vpack.c.b16 %v2341, %v2339
    %v2398 = vpack.c.b16 %v2342, %v2340
    %v2399 = vpack.c.b16 %v2345, %v2343
    %v2400 = vpack.c.b16 %v2346, %v2344
    %v2401 = vpack.c.b16 %v2349, %v2347
    %v2402 = vpack.c.b16 %v2350, %v2348
    %v2403 = vpack.c.b16 %v2353, %v2351
    %v2404 = vpack.c.b16 %v2354, %v2352
    %v2405 = vpack.c.b16 %v2357, %v2355
    %v2406 = vpack.c.b16 %v2358, %v2356
    %v2407 = vpack.c.b16 %v2361, %v2359
    %v2408 = vpack.c.b16 %v2362, %v2360
    %v2409 = vpack.c.b16 %v2365, %v2363
    %v2410 = vpack.c.b16 %v2366, %v2364
    %v2411 = vpack.c.b16 %v2369, %v2367
    %v2412 = vpack.c.b16 %v2370, %v2368
    %v2413 = vpack.c.b16 %v2373, %v2371
    %v2414 = vpack.c.b16 %v2374, %v2372
    %v2415 = vpack.c.b16 %v2377, %v2375
    %v2416 = vpack.c.b16 %v2378, %v2376
    %v2417 = vpack.c.b16 %v2381, %v2379
    %v2418 = vpack.c.b16 %v2382, %v2380
    %v2419 = vpack.c.b16 %v2385, %v2383
    %v2420 = vpack.c.b16 %v2386, %v2384
    %v2421 = vpack.c.b16 %v2389, %v2387
    %v2422 = vpack.c.b16 %v2390, %v2388
    %2455 = vmatprep.subr.bf16.mxu0 %v2406
    %2456 = vmatpush1.bf16.msra.mxu0 %v2405
    %2457 = vmatprep.subr.bf16.mxu0 %v2404
    %2458 = vmatpush1.bf16.msra.mxu0 %v2403
    %2459 = vmatprep.subr.bf16.mxu0 %v2402
    %2460 = vmatpush1.bf16.msra.mxu0 %v2401
    %2461 = vmatprep.subr.bf16.mxu0 %v2400
    %2462 = vmatpush1.bf16.msra.mxu0 %v2399
    %2463 = vmatprep.subr.bf16.mxu0 %v2398
    %2464 = vmatpush1.bf16.msra.mxu0 %v2397
    %2465 = vmatprep.subr.bf16.mxu0 %v2396
    %2466 = vmatpush1.bf16.msra.mxu0 %v2395
    %2467 = vmatprep.subr.bf16.mxu0 %v2394
    %2468 = vmatpush1.bf16.msra.mxu0 %v2393
    %2469 = vmatprep.subr.bf16.mxu0 %v2392
    %2470 = vmatpush1.bf16.msra.mxu0 %v2391
    %2471 = vmatprep.subr.bf16.mxu0 %v2422
    %2472 = vmatpush2.bf16.msra.mxu0 %v2421
    %2473 = vmatprep.subr.bf16.mxu0 %v2420
    %2474 = vmatpush2.bf16.msra.mxu0 %v2419
    %2475 = vmatprep.subr.bf16.mxu0 %v2418
    %2476 = vmatpush2.bf16.msra.mxu0 %v2417
    %2477 = vmatprep.subr.bf16.mxu0 %v2416
    %2478 = vmatpush2.bf16.msra.mxu0 %v2415
    %2479 = vmatprep.subr.bf16.mxu0 %v2414
    %2480 = vmatpush2.bf16.msra.mxu0 %v2413
    %2481 = vmatprep.subr.bf16.mxu0 %v2412
    %2482 = vmatpush2.bf16.msra.mxu0 %v2411
    %2483 = vmatprep.subr.bf16.mxu0 %v2410
    %2484 = vmatpush2.bf16.msra.mxu0 %v2409
    %2485 = vmatprep.subr.bf16.mxu0 %v2408
    %2486 = vmatpush2.bf16.msra.mxu0 %v2407
    %2487 = vmatprep.mubr.bf16.mxu0 %v2250
    %2488 = vmatmul.mubr.bf16.gmra.mxu0 %v2249
    %v2489 = vpop.f32.mrf.mxu0
    %v2490 = vadd.f32 %v2288, %v2489
    %v2491 = vpop.f32.mrf.mxu0
    %v2492 = vadd.f32 %v2292, %v2491
    %v2493 = vpop.f32.mrf.mxu0
    %v2494 = vadd.f32 %v2288, %v2493
    %v2495 = vpop.f32.mrf.mxu0
    %v2496 = vadd.f32 %v2292, %v2495
    %2497 = vdwg.mxu0
    %v2498 = vmax.f32 %v2490, 0.0
    %v2499 = vmax.f32 %v2492, 0.0
    %v2500 = vmax.f32 %v2494, 0.0
    %v2501 = vmax.f32 %v2496, 0.0
    %v2502 = vpack.c.bf16 %v2500, %v2498
    %v2503 = vpack.c.bf16 %v2501, %v2499
    %v2504 = vld [vmem:[#allocation16] sm:$0xf]
    %v2505 = vld [vmem:[#allocation16 + $0x4] sm:$0xf]
    %v2506 = vld [vmem:[#allocation16 + $0x8] sm:$0xf]
    %v2507 = vld [vmem:[#allocation16 + $0xc] sm:$0xf]
    %v2508 = vld [vmem:[#allocation16 + $0x10] sm:$0xf]
    %v2509 = vld [vmem:[#allocation16 + $0x14] sm:$0xf]
    %v2510 = vld [vmem:[#allocation16 + $0x18] sm:$0xf]
    %v2511 = vld [vmem:[#allocation16 + $0x1c] sm:$0xf]
    %v2512 = vld [vmem:[#allocation16 + $0x20] sm:$0xf]
    %v2513 = vld [vmem:[#allocation16 + $0x24] sm:$0xf]
    %v2514 = vld [vmem:[#allocation16 + $0x28] sm:$0xf]
    %v2515 = vld [vmem:[#allocation16 + $0x2c] sm:$0xf]
    %v2516 = vld [vmem:[#allocation16 + $0x30] sm:$0xf]
    %v2517 = vld [vmem:[#allocation16 + $0x34] sm:$0xf]
    %v2518 = vld [vmem:[#allocation16 + $0x38] sm:$0xf]
    %v2519 = vld [vmem:[#allocation16 + $0x3c] sm:$0xf]
    %v2520 = vld [vmem:[#allocation16 + $0x40] sm:$0xf]
    %v2521 = vld [vmem:[#allocation16 + $0x44] sm:$0xf]
    %v2522 = vld [vmem:[#allocation16 + $0x48] sm:$0xf]
    %v2523 = vld [vmem:[#allocation16 + $0x4c] sm:$0xf]
    %v2524 = vld [vmem:[#allocation16 + $0x50] sm:$0xf]
    %v2525 = vld [vmem:[#allocation16 + $0x54] sm:$0xf]
    %v2526 = vld [vmem:[#allocation16 + $0x58] sm:$0xf]
    %v2527 = vld [vmem:[#allocation16 + $0x5c] sm:$0xf]
    %v2528 = vld [vmem:[#allocation16 + $0x60] sm:$0xf]
    %v2529 = vld [vmem:[#allocation16 + $0x64] sm:$0xf]
    %v2530 = vld [vmem:[#allocation16 + $0x68] sm:$0xf]
    %v2531 = vld [vmem:[#allocation16 + $0x6c] sm:$0xf]
    %v2532 = vld [vmem:[#allocation16 + $0x70] sm:$0xf]
    %v2533 = vld [vmem:[#allocation16 + $0x74] sm:$0xf]
    %v2534 = vld [vmem:[#allocation16 + $0x78] sm:$0xf]
    %v2535 = vld [vmem:[#allocation16 + $0x7c] sm:$0xf]
    %v2536 = vld [vmem:[%s14] sm:$0x1]
    %v2538 = vlaneseq
    %v2539 = vshrl.u32 %v2538, 7
    %v2540 = vsub.s32 0, %v2539
    %v2541 = vrot.slane %v2536, %v2540
    %v2575 = vunpack.c.l.b16 %v2504
    %v2576 = vunpack.c.l.b16 %v2505
    %v2577 = vunpack.c.l.b16 %v2506
    %v2578 = vunpack.c.l.b16 %v2507
    %v2579 = vunpack.c.l.b16 %v2508
    %v2580 = vunpack.c.l.b16 %v2509
    %v2581 = vunpack.c.l.b16 %v2510
    %v2582 = vunpack.c.l.b16 %v2511
    %v2583 = vunpack.c.l.b16 %v2512
    %v2584 = vunpack.c.l.b16 %v2513
    %v2585 = vunpack.c.l.b16 %v2514
    %v2586 = vunpack.c.l.b16 %v2515
    %v2587 = vunpack.c.l.b16 %v2516
    %v2588 = vunpack.c.l.b16 %v2517
    %v2589 = vunpack.c.l.b16 %v2518
    %v2590 = vunpack.c.l.b16 %v2519
    %v2591 = vunpack.c.l.b16 %v2520
    %v2592 = vunpack.c.l.b16 %v2521
    %v2593 = vunpack.c.l.b16 %v2522
    %v2594 = vunpack.c.l.b16 %v2523
    %v2595 = vunpack.c.l.b16 %v2524
    %v2596 = vunpack.c.l.b16 %v2525
    %v2597 = vunpack.c.l.b16 %v2526
    %v2598 = vunpack.c.l.b16 %v2527
    %v2599 = vunpack.c.l.b16 %v2528
    %v2600 = vunpack.c.l.b16 %v2529
    %v2601 = vunpack.c.l.b16 %v2530
    %v2602 = vunpack.c.l.b16 %v2531
    %v2603 = vunpack.c.l.b16 %v2532
    %v2604 = vunpack.c.l.b16 %v2533
    %v2605 = vunpack.c.l.b16 %v2534
    %v2606 = vunpack.c.l.b16 %v2535
    %v2607 = vpack.c.b16 %v2576, %v2575
    %v2608 = vpack.c.b16 %v2578, %v2577
    %v2609 = vpack.c.b16 %v2580, %v2579
    %v2610 = vpack.c.b16 %v2582, %v2581
    %v2611 = vpack.c.b16 %v2584, %v2583
    %v2612 = vpack.c.b16 %v2586, %v2585
    %v2613 = vpack.c.b16 %v2588, %v2587
    %v2614 = vpack.c.b16 %v2590, %v2589
    %v2615 = vpack.c.b16 %v2592, %v2591
    %v2616 = vpack.c.b16 %v2594, %v2593
    %v2617 = vpack.c.b16 %v2596, %v2595
    %v2618 = vpack.c.b16 %v2598, %v2597
    %v2619 = vpack.c.b16 %v2600, %v2599
    %v2620 = vpack.c.b16 %v2602, %v2601
    %v2621 = vpack.c.b16 %v2604, %v2603
    %v2622 = vpack.c.b16 %v2606, %v2605
    %2639 = vmatprep.subr.bf16.mxu0 0
    %2640 = vmatpush1.bf16.msra.mxu0 %v2614
    %2641 = vmatprep.subr.bf16.mxu0 0
    %2642 = vmatpush1.bf16.msra.mxu0 %v2613
    %2643 = vmatprep.subr.bf16.mxu0 0
    %2644 = vmatpush1.bf16.msra.mxu0 %v2612
    %2645 = vmatprep.subr.bf16.mxu0 0
    %2646 = vmatpush1.bf16.msra.mxu0 %v2611
    %2647 = vmatprep.subr.bf16.mxu0 0
    %2648 = vmatpush1.bf16.msra.mxu0 %v2610
    %2649 = vmatprep.subr.bf16.mxu0 0
    %2650 = vmatpush1.bf16.msra.mxu0 %v2609
    %2651 = vmatprep.subr.bf16.mxu0 0
    %2652 = vmatpush1.bf16.msra.mxu0 %v2608
    %2653 = vmatprep.subr.bf16.mxu0 0
    %2654 = vmatpush1.bf16.msra.mxu0 %v2607
    %2655 = vmatprep.subr.bf16.mxu0 0
    %2656 = vmatpush2.bf16.msra.mxu0 %v2622
    %2657 = vmatprep.subr.bf16.mxu0 0
    %2658 = vmatpush2.bf16.msra.mxu0 %v2621
    %2659 = vmatprep.subr.bf16.mxu0 0
    %2660 = vmatpush2.bf16.msra.mxu0 %v2620
    %2661 = vmatprep.subr.bf16.mxu0 0
    %2662 = vmatpush2.bf16.msra.mxu0 %v2619
    %2663 = vmatprep.subr.bf16.mxu0 0
    %2664 = vmatpush2.bf16.msra.mxu0 %v2618
    %2665 = vmatprep.subr.bf16.mxu0 0
    %2666 = vmatpush2.bf16.msra.mxu0 %v2617
    %2667 = vmatprep.subr.bf16.mxu0 0
    %2668 = vmatpush2.bf16.msra.mxu0 %v2616
    %2669 = vmatprep.subr.bf16.mxu0 0
    %2670 = vmatpush2.bf16.msra.mxu0 %v2615
    %2671 = vmatprep.mubr.bf16.mxu0 %v2503
    %2672 = vmatmul.mubr.bf16.gmra.mxu0 %v2502
    %v2673 = vpop.f32.mrf.mxu0
    %v2674 = vadd.f32 %v2541, %v2673
    %v2675 = vpop.f32.mrf.mxu0
    %v2676 = vpop.f32.mrf.mxu0
    %v2677 = vadd.f32 %v2541, %v2676
    %v2678 = vpop.f32.mrf.mxu0
    %2679 = vdwg.mxu0
    %2680 = vst [vmem:[#allocation17] sm:$0xff] %v2674
    %2681 = vst [vmem:[#allocation17 + $0x8] sm:$0xff] %v2677
    // Predicated region
    $region98: #{tpu_custom_call.1} parent=1 // pred_check
      _
    $region99: #{tpu_custom_call.1} parent=1 // pred_check_branch
      %2683 = sbr.rel (0) target = $region101
    $region100: #{tpu_custom_call.1} parent=1 // pred_region
      %s2685 = ssub.s32 256, 256
      %2686 = vsyncadd [#allocation4], %s2685
      %s2687 = sshll.u32 [#allocation17], 4
      %s2688 = int_to_ptr.vmem [resolvable:$true] %s2687
      %2693 = dma.vmem_to_hbm [thread:$0]  %s2688, 256, %s15, [#allocation4], 128, 128, 8
    $region101: #{tpu_custom_call.1} parent=1 // pred_fallthru
      _
    // Predicated region
    $region102: #{tpu_custom_call.1} parent=1 // pred_check
      _
    $region103: #{tpu_custom_call.1} parent=1 // pred_check_branch
      %2695 = sbr.rel (0) target = $region105
    $region104: #{tpu_custom_call.1} parent=1 // pred_region
      %2696 = dma.done [#allocation4], 256
    $region105: #{tpu_custom_call.1} parent=1 // pred_fallthru
      _
    %2697 = vsyncpa [#allocation3], 1
    %2698 = vsyncpa [#allocation6], 1
    %2699 = vsyncpa [#allocation9], 1
    %2700 = vsyncpa [#allocation12], 1
    %2701 = vsyncpa [#allocation15], 1
    %2702 = vsyncpa [#allocation4], 1

</llo_original>
